<compile_context>
chip_gen: v5e
topology: v5e:2x2
jax: 0.10.0
libtpu: 0.0.40
codegen_flags: <defaults>
</compile_context>

<pallas_src>
import math

import jax
import jax.numpy as jnp
from jax import lax
from jax.experimental import pallas as pl
from jax.experimental.pallas import tpu as pltpu

NUM_TERMS = 10  # Config(num_terms=10)


def _round_up(x: int, m: int) -> int:
    return ((x + m - 1) // m) * m


def _make_eta_kernel(num_terms: int):
    """Builds the eta kernel with all per-term coefficients baked in."""

    def kernel(tre_ref, tim_ref, ore_ref, oim_ref):
        tre = tre_ref[...]
        tim = tim_ref[...]

        def cexp(k):
            # exp(i*k*pi*tau) = exp(-k*pi*Im) * (cos(k*pi*Re) + i*sin(k*pi*Re))
            kp = k * math.pi
            mag = jnp.exp(-kp * tim)
            return mag * jnp.cos(kp * tre), mag * jnp.sin(kp * tre)

        def cmul(ar, ai, br, bi):
            return ar * br - ai * bi, ar * bi + ai * br

        e0_re, e0_im = cexp(1.0 / 12.0)   # E_0 : n = 0 term (sign = +1)
        m_re, m_im = cexp(6.0)            # M   : step multiplier
        v_re, v_im = cexp(4.0)            # V_0 : up-direction multiplier
        w_re, w_im = cexp(2.0)            # W_0 : down-direction multiplier

        acc_re, acc_im = e0_re, e0_im
        eu_re, eu_im = e0_re, e0_im       # E_{+n}
        ed_re, ed_im = e0_re, e0_im       # E_{-n}

        for n in range(1, num_terms + 1):
            eu_re, eu_im = cmul(eu_re, eu_im, v_re, v_im)   # E_{+n}
            ed_re, ed_im = cmul(ed_re, ed_im, w_re, w_im)   # E_{-n}
            pr = eu_re + ed_re
            pq = eu_im + ed_im
            if n % 2 == 0:                # (-1)^n == (-1)^{-n}, exact sign
                acc_re = acc_re + pr
                acc_im = acc_im + pq
            else:
                acc_re = acc_re - pr
                acc_im = acc_im - pq
            if n < num_terms:
                v_re, v_im = cmul(v_re, v_im, m_re, m_im)
                w_re, w_im = cmul(w_re, w_im, m_re, m_im)

        ore_ref[...] = acc_re
        oim_ref[...] = acc_im

    return kernel


def dedekind_eta_pallas(tau: jnp.ndarray, num_terms: int = NUM_TERMS,
                        block_rows: int = 256) -> jnp.ndarray:
    """Dedekind eta via Euler's formula (matches DedekindEta.forward)."""
    assert tau.ndim == 2, "expected tau of shape [batch, features]"
    b, f = tau.shape

    tau = tau.astype(jnp.complex64)
    tre = jnp.real(tau).astype(jnp.float32)
    tim = jnp.imag(tau).astype(jnp.float32)

    # Lane-dense output: pad feature axis to a multiple of 128.
    f_pad = _round_up(f, 128)
    # Row tile: multiple of 8, capped so the grid has >= 2 parallel steps
    # whenever possible (keeps the second TensorCore busy on v7x).
    rows = max(8, min(block_rows, _round_up((b + 1) // 2, 8)))
    b_pad = _round_up(b, rows)

    if (b_pad, f_pad) != (b, f):
        # Pad with tau = 0 + 1j (upper half-plane) so padded lanes stay benign.
        tre = jnp.pad(tre, ((0, b_pad - b), (0, f_pad - f)))
        tim = jnp.pad(tim, ((0, b_pad - b), (0, f_pad - f)), constant_values=1.0)

    tile = pl.BlockSpec((rows, f_pad), lambda i: (i, 0))

    out_re, out_im = pl.pallas_call(
        _make_eta_kernel(num_terms),
        grid=(b_pad // rows,),
        in_specs=[tile, tile],
        out_specs=[tile, tile],
        out_shape=[jax.ShapeDtypeStruct((b_pad, f_pad), jnp.float32),
                   jax.ShapeDtypeStruct((b_pad, f_pad), jnp.float32)],
        compiler_params=pltpu.CompilerParams(
            dimension_semantics=("parallel",)),
    )(tre, tim)

    return lax.complex(out_re[:b, :f], out_im[:b, :f])


# --- pure-JAX reference (mirrors the PyTorch DedekindEta.forward) ------------
def dedekind_eta_ref(tau: jnp.ndarray, num_terms: int = NUM_TERMS) -> jnp.ndarray:
    n = jnp.arange(-num_terms, num_terms + 1, dtype=jnp.float32)
    exponent_base = (3.0 * math.pi * 1j) * (n + 1.0 / 6.0) ** 2
    root = jnp.exp(1j * math.pi * n.astype(jnp.complex64))
    exponent_tau = exponent_base * tau.astype(jnp.complex64)[..., None]
    return (root * jnp.exp(exponent_tau)).sum(axis=-1)


if __name__ == "__main__":
    key = jax.random.PRNGKey(0)
    k_re, k_im = jax.random.split(key)
    B, F = 16, 128
    tau_re = jax.random.uniform(k_re, (B, F), jnp.float32, -0.5, 0.5)
    tau_im = jax.random.uniform(k_im, (B, F), jnp.float32, 0.8, 1.2)  # Im(tau) > 0
    tau = lax.complex(tau_re, tau_im)

    # Kernel eta vs. pure-JAX reference eta.
    eta_kernel = jax.block_until_ready(dedekind_eta_pallas(tau))
    eta_ref = dedekind_eta_ref(tau)
    assert eta_kernel.shape == (B, F)
    err = float(jnp.max(jnp.abs(eta_kernel - eta_ref)))
    assert jnp.allclose(eta_kernel, eta_ref, rtol=1e-4, atol=1e-5), f"eta mismatch {err}"

    # Non-aligned shape exercises the padding / lane-dense path.
    tau_small = tau[:6, :50]
    eta_small = jax.block_until_ready(dedekind_eta_pallas(tau_small))
    assert jnp.allclose(eta_small, dedekind_eta_ref(tau_small),
                        rtol=1e-4, atol=1e-5), "eta mismatch (padded path)"

    print("KERNEL_OK")
</pallas_src>

<mosaic_0001>
module attributes {stable_mosaic.version = 11 : i64} {
  func.func @kernel(%arg0: i32, %arg1: memref<8x128xf32, #tpu.memory_space<vmem>>, %arg2: memref<8x128xf32, #tpu.memory_space<vmem>>, %arg3: memref<8x128xf32, #tpu.memory_space<vmem>>, %arg4: memref<8x128xf32, #tpu.memory_space<vmem>>) attributes {dimension_semantics = [#tpu.dimension_semantics<parallel>], iteration_bounds = array<i64: 2>, scalar_prefetch = 0 : i64, scratch_operands = 0 : i64, tpu.core_type = #tpu.core_type<tc>, window_params = [{transform_indices = @transform_0, window_bounds = array<i64: 8, 128>}, {transform_indices = @transform_1, window_bounds = array<i64: 8, 128>}, {transform_indices = @transform_2, window_bounds = array<i64: 8, 128>}, {transform_indices = @transform_3, window_bounds = array<i64: 8, 128>}]} {
    %c0 = arith.constant 0 : index
    %c0_0 = arith.constant 0 : index
    %0 = vector.load %arg1[%c0, %c0_0] : memref<8x128xf32, #tpu.memory_space<vmem>>, vector<8x128xf32>
    %c0_1 = arith.constant 0 : index
    %c0_2 = arith.constant 0 : index
    %1 = vector.load %arg2[%c0_1, %c0_2] : memref<8x128xf32, #tpu.memory_space<vmem>>, vector<8x128xf32>
    %cst = arith.constant -0.261799395 : f32
    %2 = vector.broadcast %cst : f32 to vector<8x128xf32>
    %3 = arith.mulf %2, %1 : vector<8x128xf32>
    %4 = math.exp %3 : vector<8x128xf32>
    %cst_3 = arith.constant 0.261799395 : f32
    %5 = vector.broadcast %cst_3 : f32 to vector<8x128xf32>
    %6 = arith.mulf %5, %0 : vector<8x128xf32>
    %7 = math.cos %6 : vector<8x128xf32>
    %8 = arith.mulf %4, %7 : vector<8x128xf32>
    %cst_4 = arith.constant 0.261799395 : f32
    %9 = vector.broadcast %cst_4 : f32 to vector<8x128xf32>
    %10 = arith.mulf %9, %0 : vector<8x128xf32>
    %11 = math.sin %10 : vector<8x128xf32>
    %12 = arith.mulf %4, %11 : vector<8x128xf32>
    %cst_5 = arith.constant -18.849556 : f32
    %13 = vector.broadcast %cst_5 : f32 to vector<8x128xf32>
    %14 = arith.mulf %13, %1 : vector<8x128xf32>
    %15 = math.exp %14 : vector<8x128xf32>
    %cst_6 = arith.constant 18.849556 : f32
    %16 = vector.broadcast %cst_6 : f32 to vector<8x128xf32>
    %17 = arith.mulf %16, %0 : vector<8x128xf32>
    %18 = math.cos %17 : vector<8x128xf32>
    %19 = arith.mulf %15, %18 : vector<8x128xf32>
    %cst_7 = arith.constant 18.849556 : f32
    %20 = vector.broadcast %cst_7 : f32 to vector<8x128xf32>
    %21 = arith.mulf %20, %0 : vector<8x128xf32>
    %22 = math.sin %21 : vector<8x128xf32>
    %23 = arith.mulf %15, %22 : vector<8x128xf32>
    %cst_8 = arith.constant -12.566371 : f32
    %24 = vector.broadcast %cst_8 : f32 to vector<8x128xf32>
    %25 = arith.mulf %24, %1 : vector<8x128xf32>
    %26 = math.exp %25 : vector<8x128xf32>
    %cst_9 = arith.constant 12.566371 : f32
    %27 = vector.broadcast %cst_9 : f32 to vector<8x128xf32>
    %28 = arith.mulf %27, %0 : vector<8x128xf32>
    %29 = math.cos %28 : vector<8x128xf32>
    %30 = arith.mulf %26, %29 : vector<8x128xf32>
    %cst_10 = arith.constant 12.566371 : f32
    %31 = vector.broadcast %cst_10 : f32 to vector<8x128xf32>
    %32 = arith.mulf %31, %0 : vector<8x128xf32>
    %33 = math.sin %32 : vector<8x128xf32>
    %34 = arith.mulf %26, %33 : vector<8x128xf32>
    %cst_11 = arith.constant -6.28318548 : f32
    %35 = vector.broadcast %cst_11 : f32 to vector<8x128xf32>
    %36 = arith.mulf %35, %1 : vector<8x128xf32>
    %37 = math.exp %36 : vector<8x128xf32>
    %cst_12 = arith.constant 6.28318548 : f32
    %38 = vector.broadcast %cst_12 : f32 to vector<8x128xf32>
    %39 = arith.mulf %38, %0 : vector<8x128xf32>
    %40 = math.cos %39 : vector<8x128xf32>
    %41 = arith.mulf %37, %40 : vector<8x128xf32>
    %cst_13 = arith.constant 6.28318548 : f32
    %42 = vector.broadcast %cst_13 : f32 to vector<8x128xf32>
    %43 = arith.mulf %42, %0 : vector<8x128xf32>
    %44 = math.sin %43 : vector<8x128xf32>
    %45 = arith.mulf %37, %44 : vector<8x128xf32>
    %46 = arith.mulf %8, %30 : vector<8x128xf32>
    %47 = arith.mulf %12, %34 : vector<8x128xf32>
    %48 = arith.subf %46, %47 : vector<8x128xf32>
    %49 = arith.mulf %8, %34 : vector<8x128xf32>
    %50 = arith.mulf %12, %30 : vector<8x128xf32>
    %51 = arith.addf %49, %50 : vector<8x128xf32>
    %52 = arith.mulf %8, %41 : vector<8x128xf32>
    %53 = arith.mulf %12, %45 : vector<8x128xf32>
    %54 = arith.subf %52, %53 : vector<8x128xf32>
    %55 = arith.mulf %8, %45 : vector<8x128xf32>
    %56 = arith.mulf %12, %41 : vector<8x128xf32>
    %57 = arith.addf %55, %56 : vector<8x128xf32>
    %58 = arith.addf %48, %54 : vector<8x128xf32>
    %59 = arith.addf %51, %57 : vector<8x128xf32>
    %60 = arith.subf %8, %58 : vector<8x128xf32>
    %61 = arith.subf %12, %59 : vector<8x128xf32>
    %62 = arith.mulf %30, %19 : vector<8x128xf32>
    %63 = arith.mulf %34, %23 : vector<8x128xf32>
    %64 = arith.subf %62, %63 : vector<8x128xf32>
    %65 = arith.mulf %30, %23 : vector<8x128xf32>
    %66 = arith.mulf %34, %19 : vector<8x128xf32>
    %67 = arith.addf %65, %66 : vector<8x128xf32>
    %68 = arith.mulf %41, %19 : vector<8x128xf32>
    %69 = arith.mulf %45, %23 : vector<8x128xf32>
    %70 = arith.subf %68, %69 : vector<8x128xf32>
    %71 = arith.mulf %41, %23 : vector<8x128xf32>
    %72 = arith.mulf %45, %19 : vector<8x128xf32>
    %73 = arith.addf %71, %72 : vector<8x128xf32>
    %74 = arith.mulf %48, %64 : vector<8x128xf32>
    %75 = arith.mulf %51, %67 : vector<8x128xf32>
    %76 = arith.subf %74, %75 : vector<8x128xf32>
    %77 = arith.mulf %48, %67 : vector<8x128xf32>
    %78 = arith.mulf %51, %64 : vector<8x128xf32>
    %79 = arith.addf %77, %78 : vector<8x128xf32>
    %80 = arith.mulf %54, %70 : vector<8x128xf32>
    %81 = arith.mulf %57, %73 : vector<8x128xf32>
    %82 = arith.subf %80, %81 : vector<8x128xf32>
    %83 = arith.mulf %54, %73 : vector<8x128xf32>
    %84 = arith.mulf %57, %70 : vector<8x128xf32>
    %85 = arith.addf %83, %84 : vector<8x128xf32>
    %86 = arith.addf %76, %82 : vector<8x128xf32>
    %87 = arith.addf %79, %85 : vector<8x128xf32>
    %88 = arith.addf %60, %86 : vector<8x128xf32>
    %89 = arith.addf %61, %87 : vector<8x128xf32>
    %90 = arith.mulf %64, %19 : vector<8x128xf32>
    %91 = arith.mulf %67, %23 : vector<8x128xf32>
    %92 = arith.subf %90, %91 : vector<8x128xf32>
    %93 = arith.mulf %64, %23 : vector<8x128xf32>
    %94 = arith.mulf %67, %19 : vector<8x128xf32>
    %95 = arith.addf %93, %94 : vector<8x128xf32>
    %96 = arith.mulf %70, %19 : vector<8x128xf32>
    %97 = arith.mulf %73, %23 : vector<8x128xf32>
    %98 = arith.subf %96, %97 : vector<8x128xf32>
    %99 = arith.mulf %70, %23 : vector<8x128xf32>
    %100 = arith.mulf %73, %19 : vector<8x128xf32>
    %101 = arith.addf %99, %100 : vector<8x128xf32>
    %102 = arith.mulf %76, %92 : vector<8x128xf32>
    %103 = arith.mulf %79, %95 : vector<8x128xf32>
    %104 = arith.subf %102, %103 : vector<8x128xf32>
    %105 = arith.mulf %76, %95 : vector<8x128xf32>
    %106 = arith.mulf %79, %92 : vector<8x128xf32>
    %107 = arith.addf %105, %106 : vector<8x128xf32>
    %108 = arith.mulf %82, %98 : vector<8x128xf32>
    %109 = arith.mulf %85, %101 : vector<8x128xf32>
    %110 = arith.subf %108, %109 : vector<8x128xf32>
    %111 = arith.mulf %82, %101 : vector<8x128xf32>
    %112 = arith.mulf %85, %98 : vector<8x128xf32>
    %113 = arith.addf %111, %112 : vector<8x128xf32>
    %114 = arith.addf %104, %110 : vector<8x128xf32>
    %115 = arith.addf %107, %113 : vector<8x128xf32>
    %116 = arith.subf %88, %114 : vector<8x128xf32>
    %117 = arith.subf %89, %115 : vector<8x128xf32>
    %118 = arith.mulf %92, %19 : vector<8x128xf32>
    %119 = arith.mulf %95, %23 : vector<8x128xf32>
    %120 = arith.subf %118, %119 : vector<8x128xf32>
    %121 = arith.mulf %92, %23 : vector<8x128xf32>
    %122 = arith.mulf %95, %19 : vector<8x128xf32>
    %123 = arith.addf %121, %122 : vector<8x128xf32>
    %124 = arith.mulf %98, %19 : vector<8x128xf32>
    %125 = arith.mulf %101, %23 : vector<8x128xf32>
    %126 = arith.subf %124, %125 : vector<8x128xf32>
    %127 = arith.mulf %98, %23 : vector<8x128xf32>
    %128 = arith.mulf %101, %19 : vector<8x128xf32>
    %129 = arith.addf %127, %128 : vector<8x128xf32>
    %130 = arith.mulf %104, %120 : vector<8x128xf32>
    %131 = arith.mulf %107, %123 : vector<8x128xf32>
    %132 = arith.subf %130, %131 : vector<8x128xf32>
    %133 = arith.mulf %104, %123 : vector<8x128xf32>
    %134 = arith.mulf %107, %120 : vector<8x128xf32>
    %135 = arith.addf %133, %134 : vector<8x128xf32>
    %136 = arith.mulf %110, %126 : vector<8x128xf32>
    %137 = arith.mulf %113, %129 : vector<8x128xf32>
    %138 = arith.subf %136, %137 : vector<8x128xf32>
    %139 = arith.mulf %110, %129 : vector<8x128xf32>
    %140 = arith.mulf %113, %126 : vector<8x128xf32>
    %141 = arith.addf %139, %140 : vector<8x128xf32>
    %142 = arith.addf %132, %138 : vector<8x128xf32>
    %143 = arith.addf %135, %141 : vector<8x128xf32>
    %144 = arith.addf %116, %142 : vector<8x128xf32>
    %145 = arith.addf %117, %143 : vector<8x128xf32>
    %146 = arith.mulf %120, %19 : vector<8x128xf32>
    %147 = arith.mulf %123, %23 : vector<8x128xf32>
    %148 = arith.subf %146, %147 : vector<8x128xf32>
    %149 = arith.mulf %120, %23 : vector<8x128xf32>
    %150 = arith.mulf %123, %19 : vector<8x128xf32>
    %151 = arith.addf %149, %150 : vector<8x128xf32>
    %152 = arith.mulf %126, %19 : vector<8x128xf32>
    %153 = arith.mulf %129, %23 : vector<8x128xf32>
    %154 = arith.subf %152, %153 : vector<8x128xf32>
    %155 = arith.mulf %126, %23 : vector<8x128xf32>
    %156 = arith.mulf %129, %19 : vector<8x128xf32>
    %157 = arith.addf %155, %156 : vector<8x128xf32>
    %158 = arith.mulf %132, %148 : vector<8x128xf32>
    %159 = arith.mulf %135, %151 : vector<8x128xf32>
    %160 = arith.subf %158, %159 : vector<8x128xf32>
    %161 = arith.mulf %132, %151 : vector<8x128xf32>
    %162 = arith.mulf %135, %148 : vector<8x128xf32>
    %163 = arith.addf %161, %162 : vector<8x128xf32>
    %164 = arith.mulf %138, %154 : vector<8x128xf32>
    %165 = arith.mulf %141, %157 : vector<8x128xf32>
    %166 = arith.subf %164, %165 : vector<8x128xf32>
    %167 = arith.mulf %138, %157 : vector<8x128xf32>
    %168 = arith.mulf %141, %154 : vector<8x128xf32>
    %169 = arith.addf %167, %168 : vector<8x128xf32>
    %170 = arith.addf %160, %166 : vector<8x128xf32>
    %171 = arith.addf %163, %169 : vector<8x128xf32>
    %172 = arith.subf %144, %170 : vector<8x128xf32>
    %173 = arith.subf %145, %171 : vector<8x128xf32>
    %174 = arith.mulf %148, %19 : vector<8x128xf32>
    %175 = arith.mulf %151, %23 : vector<8x128xf32>
    %176 = arith.subf %174, %175 : vector<8x128xf32>
    %177 = arith.mulf %148, %23 : vector<8x128xf32>
    %178 = arith.mulf %151, %19 : vector<8x128xf32>
    %179 = arith.addf %177, %178 : vector<8x128xf32>
    %180 = arith.mulf %154, %19 : vector<8x128xf32>
    %181 = arith.mulf %157, %23 : vector<8x128xf32>
    %182 = arith.subf %180, %181 : vector<8x128xf32>
    %183 = arith.mulf %154, %23 : vector<8x128xf32>
    %184 = arith.mulf %157, %19 : vector<8x128xf32>
    %185 = arith.addf %183, %184 : vector<8x128xf32>
    %186 = arith.mulf %160, %176 : vector<8x128xf32>
    %187 = arith.mulf %163, %179 : vector<8x128xf32>
    %188 = arith.subf %186, %187 : vector<8x128xf32>
    %189 = arith.mulf %160, %179 : vector<8x128xf32>
    %190 = arith.mulf %163, %176 : vector<8x128xf32>
    %191 = arith.addf %189, %190 : vector<8x128xf32>
    %192 = arith.mulf %166, %182 : vector<8x128xf32>
    %193 = arith.mulf %169, %185 : vector<8x128xf32>
    %194 = arith.subf %192, %193 : vector<8x128xf32>
    %195 = arith.mulf %166, %185 : vector<8x128xf32>
    %196 = arith.mulf %169, %182 : vector<8x128xf32>
    %197 = arith.addf %195, %196 : vector<8x128xf32>
    %198 = arith.addf %188, %194 : vector<8x128xf32>
    %199 = arith.addf %191, %197 : vector<8x128xf32>
    %200 = arith.addf %172, %198 : vector<8x128xf32>
    %201 = arith.addf %173, %199 : vector<8x128xf32>
    %202 = arith.mulf %176, %19 : vector<8x128xf32>
    %203 = arith.mulf %179, %23 : vector<8x128xf32>
    %204 = arith.subf %202, %203 : vector<8x128xf32>
    %205 = arith.mulf %176, %23 : vector<8x128xf32>
    %206 = arith.mulf %179, %19 : vector<8x128xf32>
    %207 = arith.addf %205, %206 : vector<8x128xf32>
    %208 = arith.mulf %182, %19 : vector<8x128xf32>
    %209 = arith.mulf %185, %23 : vector<8x128xf32>
    %210 = arith.subf %208, %209 : vector<8x128xf32>
    %211 = arith.mulf %182, %23 : vector<8x128xf32>
    %212 = arith.mulf %185, %19 : vector<8x128xf32>
    %213 = arith.addf %211, %212 : vector<8x128xf32>
    %214 = arith.mulf %188, %204 : vector<8x128xf32>
    %215 = arith.mulf %191, %207 : vector<8x128xf32>
    %216 = arith.subf %214, %215 : vector<8x128xf32>
    %217 = arith.mulf %188, %207 : vector<8x128xf32>
    %218 = arith.mulf %191, %204 : vector<8x128xf32>
    %219 = arith.addf %217, %218 : vector<8x128xf32>
    %220 = arith.mulf %194, %210 : vector<8x128xf32>
    %221 = arith.mulf %197, %213 : vector<8x128xf32>
    %222 = arith.subf %220, %221 : vector<8x128xf32>
    %223 = arith.mulf %194, %213 : vector<8x128xf32>
    %224 = arith.mulf %197, %210 : vector<8x128xf32>
    %225 = arith.addf %223, %224 : vector<8x128xf32>
    %226 = arith.addf %216, %222 : vector<8x128xf32>
    %227 = arith.addf %219, %225 : vector<8x128xf32>
    %228 = arith.subf %200, %226 : vector<8x128xf32>
    %229 = arith.subf %201, %227 : vector<8x128xf32>
    %230 = arith.mulf %204, %19 : vector<8x128xf32>
    %231 = arith.mulf %207, %23 : vector<8x128xf32>
    %232 = arith.subf %230, %231 : vector<8x128xf32>
    %233 = arith.mulf %204, %23 : vector<8x128xf32>
    %234 = arith.mulf %207, %19 : vector<8x128xf32>
    %235 = arith.addf %233, %234 : vector<8x128xf32>
    %236 = arith.mulf %210, %19 : vector<8x128xf32>
    %237 = arith.mulf %213, %23 : vector<8x128xf32>
    %238 = arith.subf %236, %237 : vector<8x128xf32>
    %239 = arith.mulf %210, %23 : vector<8x128xf32>
    %240 = arith.mulf %213, %19 : vector<8x128xf32>
    %241 = arith.addf %239, %240 : vector<8x128xf32>
    %242 = arith.mulf %216, %232 : vector<8x128xf32>
    %243 = arith.mulf %219, %235 : vector<8x128xf32>
    %244 = arith.subf %242, %243 : vector<8x128xf32>
    %245 = arith.mulf %216, %235 : vector<8x128xf32>
    %246 = arith.mulf %219, %232 : vector<8x128xf32>
    %247 = arith.addf %245, %246 : vector<8x128xf32>
    %248 = arith.mulf %222, %238 : vector<8x128xf32>
    %249 = arith.mulf %225, %241 : vector<8x128xf32>
    %250 = arith.subf %248, %249 : vector<8x128xf32>
    %251 = arith.mulf %222, %241 : vector<8x128xf32>
    %252 = arith.mulf %225, %238 : vector<8x128xf32>
    %253 = arith.addf %251, %252 : vector<8x128xf32>
    %254 = arith.addf %244, %250 : vector<8x128xf32>
    %255 = arith.addf %247, %253 : vector<8x128xf32>
    %256 = arith.addf %228, %254 : vector<8x128xf32>
    %257 = arith.addf %229, %255 : vector<8x128xf32>
    %258 = arith.mulf %232, %19 : vector<8x128xf32>
    %259 = arith.mulf %235, %23 : vector<8x128xf32>
    %260 = arith.subf %258, %259 : vector<8x128xf32>
    %261 = arith.mulf %232, %23 : vector<8x128xf32>
    %262 = arith.mulf %235, %19 : vector<8x128xf32>
    %263 = arith.addf %261, %262 : vector<8x128xf32>
    %264 = arith.mulf %238, %19 : vector<8x128xf32>
    %265 = arith.mulf %241, %23 : vector<8x128xf32>
    %266 = arith.subf %264, %265 : vector<8x128xf32>
    %267 = arith.mulf %238, %23 : vector<8x128xf32>
    %268 = arith.mulf %241, %19 : vector<8x128xf32>
    %269 = arith.addf %267, %268 : vector<8x128xf32>
    %270 = arith.mulf %244, %260 : vector<8x128xf32>
    %271 = arith.mulf %247, %263 : vector<8x128xf32>
    %272 = arith.subf %270, %271 : vector<8x128xf32>
    %273 = arith.mulf %244, %263 : vector<8x128xf32>
    %274 = arith.mulf %247, %260 : vector<8x128xf32>
    %275 = arith.addf %273, %274 : vector<8x128xf32>
    %276 = arith.mulf %250, %266 : vector<8x128xf32>
    %277 = arith.mulf %253, %269 : vector<8x128xf32>
    %278 = arith.subf %276, %277 : vector<8x128xf32>
    %279 = arith.mulf %250, %269 : vector<8x128xf32>
    %280 = arith.mulf %253, %266 : vector<8x128xf32>
    %281 = arith.addf %279, %280 : vector<8x128xf32>
    %282 = arith.addf %272, %278 : vector<8x128xf32>
    %283 = arith.addf %275, %281 : vector<8x128xf32>
    %284 = arith.subf %256, %282 : vector<8x128xf32>
    %285 = arith.subf %257, %283 : vector<8x128xf32>
    %286 = arith.mulf %260, %19 : vector<8x128xf32>
    %287 = arith.mulf %263, %23 : vector<8x128xf32>
    %288 = arith.subf %286, %287 : vector<8x128xf32>
    %289 = arith.mulf %260, %23 : vector<8x128xf32>
    %290 = arith.mulf %263, %19 : vector<8x128xf32>
    %291 = arith.addf %289, %290 : vector<8x128xf32>
    %292 = arith.mulf %266, %19 : vector<8x128xf32>
    %293 = arith.mulf %269, %23 : vector<8x128xf32>
    %294 = arith.subf %292, %293 : vector<8x128xf32>
    %295 = arith.mulf %266, %23 : vector<8x128xf32>
    %296 = arith.mulf %269, %19 : vector<8x128xf32>
    %297 = arith.addf %295, %296 : vector<8x128xf32>
    %298 = arith.mulf %272, %288 : vector<8x128xf32>
    %299 = arith.mulf %275, %291 : vector<8x128xf32>
    %300 = arith.subf %298, %299 : vector<8x128xf32>
    %301 = arith.mulf %272, %291 : vector<8x128xf32>
    %302 = arith.mulf %275, %288 : vector<8x128xf32>
    %303 = arith.addf %301, %302 : vector<8x128xf32>
    %304 = arith.mulf %278, %294 : vector<8x128xf32>
    %305 = arith.mulf %281, %297 : vector<8x128xf32>
    %306 = arith.subf %304, %305 : vector<8x128xf32>
    %307 = arith.mulf %278, %297 : vector<8x128xf32>
    %308 = arith.mulf %281, %294 : vector<8x128xf32>
    %309 = arith.addf %307, %308 : vector<8x128xf32>
    %310 = arith.addf %300, %306 : vector<8x128xf32>
    %311 = arith.addf %303, %309 : vector<8x128xf32>
    %312 = arith.addf %284, %310 : vector<8x128xf32>
    %313 = arith.addf %285, %311 : vector<8x128xf32>
    %c0_14 = arith.constant 0 : index
    %c0_15 = arith.constant 0 : index
    %314 = vector.load %arg3[%c0_14, %c0_15] : memref<8x128xf32, #tpu.memory_space<vmem>>, vector<8x128xf32>
    tpu.vector_store %arg3[%c0_14, %c0_15], %312 {strides = array<i32>} : memref<8x128xf32, #tpu.memory_space<vmem>>, vector<8x128xf32>,
    %c0_16 = arith.constant 0 : index
    %c0_17 = arith.constant 0 : index
    %315 = vector.load %arg4[%c0_16, %c0_17] : memref<8x128xf32, #tpu.memory_space<vmem>>, vector<8x128xf32>
    tpu.vector_store %arg4[%c0_16, %c0_17], %313 {strides = array<i32>} : memref<8x128xf32, #tpu.memory_space<vmem>>, vector<8x128xf32>,
    return
  }
  func.func @transform_0(%arg0: i32) -> (i32, i32) {
    %c0_i32 = arith.constant 0 : i32
    %c0_i32_0 = arith.constant 0 : i32
    return %arg0, %c0_i32 : i32, i32
  }
  func.func @transform_1(%arg0: i32) -> (i32, i32) {
    %c0_i32 = arith.constant 0 : i32
    %c0_i32_0 = arith.constant 0 : i32
    return %arg0, %c0_i32 : i32, i32
  }
  func.func @transform_2(%arg0: i32) -> (i32, i32) {
    %c0_i32 = arith.constant 0 : i32
    %c0_i32_0 = arith.constant 0 : i32
    return %arg0, %c0_i32 : i32, i32
  }
  func.func @transform_3(%arg0: i32) -> (i32, i32) {
    %c0_i32 = arith.constant 0 : i32
    %c0_i32_0 = arith.constant 0 : i32
    return %arg0, %c0_i32 : i32, i32
  }
}

</mosaic_0001>

<llo_original>
// kernel: tpu_custom_call.1
$region0: #{tpu_custom_call.1}
  #allocation0 [shape = 'u32[]', space=smem, size = 0x4, offset = 0x4, fixed_abs, tag = 'smem constant byte address 0x4 - core index']
  #allocation1 [shape = 'u32[72,128]{1,0:T(1,128)}', space=vmem, size = 0x9000, scoped, tag = 'internal scratch']
  %s0 = inlined_call_operand.hbm [shape: f32[16,128], index: 0, kind: input, shape index: {}]
  %s1 = inlined_call_operand.hbm [shape: f32[16,128], index: 1, kind: input, shape index: {}]
  %s2 = inlined_call_operand.hbm [shape: f32[16,128], index: 2, kind: output, shape index: {0}]
  %s3 = inlined_call_operand.hbm [shape: f32[16,128], index: 3, kind: output, shape index: {1}]
  %4 = xla_tuple %s2, %s3
  %s5 = sld [smem:[#allocation0]]
  $region57: #{tpu_custom_call.1} parent=0
    _
  %s7 = ssub.s32 1, %s5
  %s8 = scalar_select 0, %s7, %s5
  $region1: #{tpu_custom_call.1} parent=0
    #allocation2 [shape = 'u8[8192]{0}', space=vmem, size = 0x2000, scoped, tag = 'input window, operand 0']
    #allocation3 [shape = 's32[2]{0}', space=sflag, size = 0x8, scoped, tag = 'scoped memory for tpu_custom_call.1']
    #allocation4 [shape = 's32[2]{0}', space=sflag, size = 0x8, scoped, tag = 'scoped memory for tpu_custom_call.1']
    #allocation5 [shape = 'u8[8192]{0}', space=vmem, size = 0x2000, scoped, tag = 'input window, operand 1']
    #allocation6 [shape = 's32[2]{0}', space=sflag, size = 0x8, scoped, tag = 'scoped memory for tpu_custom_call.1']
    #allocation7 [shape = 'u8[8192]{0}', space=vmem, size = 0x2000, scoped, tag = 'output window, operand 0']
    #allocation8 [shape = 'u8[8192]{0}', space=vmem, size = 0x2000, scoped, tag = 'output window, operand 1']
    #allocation9 [shape = 's32[2]{0}', space=sflag, size = 0x8, scoped, tag = 'scoped memory for tpu_custom_call.1']
    %9 = vsyncpa [#allocation3], 0
    %s10 = scalar_lea.sflag [#allocation3], 1
    %11 = vsyncpa %s10, 0
    %12 = vsyncpa [#allocation6], 0
    %s13 = scalar_lea.sflag [#allocation6], 1
    %14 = vsyncpa %s13, 0
    %15 = vsyncpa [#allocation4], 0
    %s16 = scalar_lea.sflag [#allocation4], 1
    %17 = vsyncpa %s16, 0
    %18 = vsyncpa [#allocation9], 0
    %s19 = scalar_lea.sflag [#allocation9], 1
    %20 = vsyncpa %s19, 0
    loop: start=0, step=1, limit=4
    $region2: #{tpu_custom_call.1} parent=1 // loop_pre_header
      _
    $region3: #{tpu_custom_call.1} parent=1 // loop_header
      %s22 = sphi 0, %s26
      %p23 = scmp.ge.s32.totalorder %s22, 4
      %s32 = sphi 0, %s34
      %s35 = sphi 0, %s32
      %s36 = sphi 0, %s35
      %s52 = sphi 0, %s36
      %s58 = sphi 0, %s60
      %s61 = sphi 0, %s58
      %s62 = sphi 0, %s61
      %s78 = sphi 0, %s62
      %s84 = sphi 0, %s86
      %s87 = sphi 0, %s84
      %s88 = sphi 0, %s87
      %s104 = sphi 0, %s88
      %s110 = sphi 0, %s112
      %s113 = sphi 0, %s110
      %s114 = sphi 0, %s113
      %s130 = sphi 0, %s114
    $region4: #{tpu_custom_call.1} parent=1 // loop_header_branch
      %25 = sbr.rel (%p23) target = $region8
    $region5: #{tpu_custom_call.1} parent=1 // loop_body
      %s27 = ssub.s32 %s22, 1
      %s28 = ssub.s32 %s22, 2
      %s29 = sadd.s32 %s22, 1
      %s30 = ssub.s32 %s22, %s29
      %p31 = scmp.eq.s32.totalorder %s30, 0
      %s33 = sadd.s32 %s32, 1
      %s34 = scalar_select %p31, %s32, %s33
      %p37 = pneg %p31
      %p38 = scmp.eq.s32.totalorder %s22, 1
      %p39 = por %p37, %p38
      %p40 = scmp.ne.s32.totalorder %s32, %s35
      %p41 = scmp.eq.s32.totalorder %s22, 0
      %p42 = por %p40, %p41
      %p43 = scmp.ne.s32.totalorder %s32, %s35
      %p44 = scmp.eq.s32.totalorder %s27, 1
      %p45 = por %p43, %p44
      %p46 = scmp.ne.s32.totalorder %s35, %s36
      %p47 = scmp.eq.s32.totalorder %s27, 0
      %p48 = por %p46, %p47
      %p49 = scmp.ne.s32.totalorder %s35, %s36
      %p50 = scmp.eq.s32.totalorder %s28, 1
      %p51 = por %p49, %p50
      %p53 = scmp.ne.s32.totalorder %s36, %s52
      %p54 = scmp.eq.s32.totalorder %s28, 0
      %p55 = por %p53, %p54
      %s56 = ssub.s32 %s22, %s29
      %p57 = scmp.eq.s32.totalorder %s56, 0
      %s59 = sadd.s32 %s58, 1
      %s60 = scalar_select %p57, %s58, %s59
      %p63 = pneg %p57
      %p64 = scmp.eq.s32.totalorder %s22, 1
      %p65 = por %p63, %p64
      %p66 = scmp.ne.s32.totalorder %s58, %s61
      %p67 = scmp.eq.s32.totalorder %s22, 0
      %p68 = por %p66, %p67
      %p69 = scmp.ne.s32.totalorder %s58, %s61
      %p70 = scmp.eq.s32.totalorder %s27, 1
      %p71 = por %p69, %p70
      %p72 = scmp.ne.s32.totalorder %s61, %s62
      %p73 = scmp.eq.s32.totalorder %s27, 0
      %p74 = por %p72, %p73
      %p75 = scmp.ne.s32.totalorder %s61, %s62
      %p76 = scmp.eq.s32.totalorder %s28, 1
      %p77 = por %p75, %p76
      %p79 = scmp.ne.s32.totalorder %s62, %s78
      %p80 = scmp.eq.s32.totalorder %s28, 0
      %p81 = por %p79, %p80
      %s82 = ssub.s32 %s22, %s29
      %p83 = scmp.eq.s32.totalorder %s82, 0
      %s85 = sadd.s32 %s84, 1
      %s86 = scalar_select %p83, %s84, %s85
      %p89 = pneg %p83
      %p90 = scmp.eq.s32.totalorder %s22, 1
      %p91 = por %p89, %p90
      %p92 = scmp.ne.s32.totalorder %s84, %s87
      %p93 = scmp.eq.s32.totalorder %s22, 0
      %p94 = por %p92, %p93
      %p95 = scmp.ne.s32.totalorder %s84, %s87
      %p96 = scmp.eq.s32.totalorder %s27, 1
      %p97 = por %p95, %p96
      %p98 = scmp.ne.s32.totalorder %s87, %s88
      %p99 = scmp.eq.s32.totalorder %s27, 0
      %p100 = por %p98, %p99
      %p101 = scmp.ne.s32.totalorder %s87, %s88
      %p102 = scmp.eq.s32.totalorder %s28, 1
      %p103 = por %p101, %p102
      %p105 = scmp.ne.s32.totalorder %s88, %s104
      %p106 = scmp.eq.s32.totalorder %s28, 0
      %p107 = por %p105, %p106
      %s108 = ssub.s32 %s22, %s29
      %p109 = scmp.eq.s32.totalorder %s108, 0
      %s111 = sadd.s32 %s110, 1
      %s112 = scalar_select %p109, %s110, %s111
      %p115 = pneg %p109
      %p116 = scmp.eq.s32.totalorder %s22, 1
      %p117 = por %p115, %p116
      %p118 = scmp.ne.s32.totalorder %s110, %s113
      %p119 = scmp.eq.s32.totalorder %s22, 0
      %p120 = por %p118, %p119
      %p121 = scmp.ne.s32.totalorder %s110, %s113
      %p122 = scmp.eq.s32.totalorder %s27, 1
      %p123 = por %p121, %p122
      %p124 = scmp.ne.s32.totalorder %s113, %s114
      %p125 = scmp.eq.s32.totalorder %s27, 0
      %p126 = por %p124, %p125
      %p127 = scmp.ne.s32.totalorder %s113, %s114
      %p128 = scmp.eq.s32.totalorder %s28, 1
      %p129 = por %p127, %p128
      %p131 = scmp.ne.s32.totalorder %s114, %s130
      %p132 = scmp.eq.s32.totalorder %s28, 0
      %p133 = por %p131, %p132
      %p134 = scmp.le.s32.totalorder 1, %s22
      %p135 = scmp.lt.s32.totalorder %s22, 3
      %p136 = pnand %p134, %p135
      %p137 = pneg %p136
      // Predicated region
      $region9: #{tpu_custom_call.1} parent=5 // pred_check
        _
      $region10: #{tpu_custom_call.1} parent=5 // pred_check_branch
        %139 = sbr.rel (%p136) target = $region12
      $region11: #{tpu_custom_call.1} parent=5 // pred_region
        %s140 = ssub.s32 %s22, 1
      $region12: #{tpu_custom_call.1} parent=5 // pred_fallthru
        _
      %p141 = scmp.lt.s32.totalorder %s22, 2
      // Predicated region
      $region13: #{tpu_custom_call.1} parent=5 // pred_check
        %p142 = pneg %p141
      $region14: #{tpu_custom_call.1} parent=5 // pred_check_branch
        %144 = sbr.rel (%p142) target = $region16
      $region15: #{tpu_custom_call.1} parent=5 // pred_region
        // Predicated region
        $region17: #{tpu_custom_call.1} parent=15 // pred_check
          %p145 = pneg %p42
        $region18: #{tpu_custom_call.1} parent=15 // pred_check_branch
          %147 = sbr.rel (%p145) target = $region20
        $region19: #{tpu_custom_call.1} parent=15 // pred_region
          %s148 = sand.u32 %s32, 1
          %s149 = scalar_lea.sflag [#allocation3], %s148
          %s150 = sand.u32 %s32, 1
          %s151 = smul.addr %s150, 8
          %s152 = scalar_lea.vmem [#allocation2], %s151
          %154 = vsyncadd %s149, 0
          %s155 = smul.addr %s22, 8
          %s156 = scalar_lea.hbm %s0, %s155
          %s158 = sshll.u32 %s156, 4
          %s159 = int_to_ptr.hbm [resolvable:$true] %s158
          %s160 = sshll.u32 %s152, 4
          %s161 = int_to_ptr.vmem [resolvable:$true] %s160
          %163 = dma.hbm_to_vmem [thread:$0]  %s159, 128, %s161, %s149
        $region20: #{tpu_custom_call.1} parent=15 // pred_fallthru
          _
        // Predicated region
        $region21: #{tpu_custom_call.1} parent=15 // pred_check
          %p164 = pneg %p68
        $region22: #{tpu_custom_call.1} parent=15 // pred_check_branch
          %166 = sbr.rel (%p164) target = $region24
        $region23: #{tpu_custom_call.1} parent=15 // pred_region
          %s167 = sand.u32 %s58, 1
          %s168 = scalar_lea.sflag [#allocation6], %s167
          %s169 = sand.u32 %s58, 1
          %s170 = smul.addr %s169, 8
          %s171 = scalar_lea.vmem [#allocation5], %s170
          %173 = vsyncadd %s168, 0
          %s174 = smul.addr %s22, 8
          %s175 = scalar_lea.hbm %s1, %s174
          %s177 = sshll.u32 %s175, 4
          %s178 = int_to_ptr.hbm [resolvable:$true] %s177
          %s179 = sshll.u32 %s171, 4
          %s180 = int_to_ptr.vmem [resolvable:$true] %s179
          %182 = dma.hbm_to_vmem [thread:$0]  %s178, 128, %s180, %s168
        $region24: #{tpu_custom_call.1} parent=15 // pred_fallthru
          _
      $region16: #{tpu_custom_call.1} parent=5 // pred_fallthru
        _
      %p183 = scmp.le.s32.totalorder 1, %s22
      %p184 = scmp.lt.s32.totalorder %s22, 3
      %p185 = pnand %p183, %p184
      %p186 = pneg %p185
      // Predicated region
      $region25: #{tpu_custom_call.1} parent=5 // pred_check
        _
      $region26: #{tpu_custom_call.1} parent=5 // pred_check_branch
        %188 = sbr.rel (%p185) target = $region28
      $region27: #{tpu_custom_call.1} parent=5 // pred_region
        %s189 = ssub.s32 %s22, 1
        %s190 = sand.u32 %s35, 1
        %s191 = scalar_lea.sflag [#allocation3], %s190
        %s192 = sand.u32 %s35, 1
        %s193 = smul.addr %s192, 8
        %s194 = scalar_lea.vmem [#allocation2], %s193
        // Predicated region
        $region29: #{tpu_custom_call.1} parent=27 // pred_check
          %p195 = pneg %p48
        $region30: #{tpu_custom_call.1} parent=27 // pred_check_branch
          %197 = sbr.rel (%p195) target = $region32
        $region31: #{tpu_custom_call.1} parent=27 // pred_region
          %199 = dma.done %s191, 128
        $region32: #{tpu_custom_call.1} parent=27 // pred_fallthru
          _
        %s200 = sand.u32 %s61, 1
        %s201 = scalar_lea.sflag [#allocation6], %s200
        %s202 = sand.u32 %s61, 1
        %s203 = smul.addr %s202, 8
        %s204 = scalar_lea.vmem [#allocation5], %s203
        // Predicated region
        $region33: #{tpu_custom_call.1} parent=27 // pred_check
          %p205 = pneg %p74
        $region34: #{tpu_custom_call.1} parent=27 // pred_check_branch
          %207 = sbr.rel (%p205) target = $region36
        $region35: #{tpu_custom_call.1} parent=27 // pred_region
          %209 = dma.done %s201, 128
        $region36: #{tpu_custom_call.1} parent=27 // pred_fallthru
          _
        %s210 = sand.u32 %s35, 1
        %s211 = scalar_lea.sflag [#allocation3], %s210
        %s212 = sand.u32 %s35, 1
        %s213 = smul.addr %s212, 8
        %s214 = scalar_lea.vmem [#allocation2], %s213
        %p215 = pneg %p48
        %p216 = pneg %p45
        %s217 = sand.u32 %s61, 1
        %s218 = scalar_lea.sflag [#allocation6], %s217
        %s219 = sand.u32 %s61, 1
        %s220 = smul.addr %s219, 8
        %s221 = scalar_lea.vmem [#allocation5], %s220
        %p222 = pneg %p74
        %p223 = pneg %p71
        %p224 = pneg %p100
        %p225 = pneg %p97
        %s226 = sand.u32 %s87, 1
        %s227 = scalar_lea.sflag [#allocation4], %s226
        %s228 = sand.u32 %s87, 1
        %s229 = smul.addr %s228, 8
        %s230 = scalar_lea.vmem [#allocation7], %s229
        %p231 = pneg %p126
        %p232 = pneg %p123
        %s233 = sand.u32 %s113, 1
        %s234 = scalar_lea.sflag [#allocation9], %s233
        %s235 = sand.u32 %s113, 1
        %s236 = smul.addr %s235, 8
        %s237 = scalar_lea.vmem [#allocation8], %s236
        %v238 = vld [vmem:[%s194] sm:$0xff]
        %v239 = vld [vmem:[%s204] sm:$0xff]
        %v240 = vmul.f32 %v239, -0.2617994
        %v241 = vmul.f32 %v240, 1.442695
        %v242 = vpow.pop %v241
        %v243 = vmul.f32 %v238, 0.2617994
        %v244 = vand.u32 2147483647, %v243
        %vm245 = vcmp.le.f32.partialorder %v244, 0.7853982
        %vm246 = vcmp.lt.s32.totalorder %v243, 0
        %v247 = vand.u32 %v243, 2139095040
        %v248 = vshrl.u32 %v247, 23
        %v249 = vsub.s32 %v248, 127
        %v250 = vand.u32 2147483647, %v243
        %v251 = vand.u32 %v250, 8388607
        %v252 = vor.u32 %v251, 8388608
        %v253 = vsub.s32 0, %v252
        %v254 = vadd.s32 %v249, 1
        %vm255 = vcmp.gt.s32.totalorder %v254, 0
        %v256 = vsel %vm255, %v254, 0
        %v257 = vshrl.u32 %v256, 5
        %v258 = vand.u32 %v256, 31
        %v259 = vsub.s32 32, %v258
        %v260 = vshrl.u32 683565275, %v259
        %v261 = vshll.u32 683565275, %v258
        %v262 = vshrl.u32 2475754826, %v259
        %v263 = vor.u32 %v261, %v262
        %v264 = vshll.u32 2475754826, %v258
        %v265 = vshrl.u32 2131351028, %v259
        %v266 = vor.u32 %v264, %v265
        %v267 = vshll.u32 2131351028, %v258
        %v268 = vshrl.u32 2102212464, %v259
        %v269 = vor.u32 %v267, %v268
        %v270 = vshll.u32 2102212464, %v258
        %v271 = vshrl.u32 920167782, %v259
        %v272 = vor.u32 %v270, %v271
        %v273 = vshll.u32 920167782, %v258
        %v274 = vshrl.u32 1326507024, %v259
        %v275 = vor.u32 %v273, %v274
        %vm276 = vcmp.lt.s32.totalorder %v257, 1
        %vm277 = vcmp.lt.s32.totalorder %v257, 2
        %vm278 = vcmp.lt.s32.totalorder %v257, 3
        %vm279 = vcmp.lt.s32.totalorder %v257, 4
        %v280 = vsel %vm276, %v260, %v263
        %v281 = vsel %vm279, %v269, 2102212464
        %v282 = vsel %vm278, %v266, %v281
        %v283 = vsel %vm277, %v280, %v282
        %v284 = vsel %vm276, %v263, %v266
        %v285 = vsel %vm279, %v272, 920167782
        %v286 = vsel %vm278, %v269, %v285
        %v287 = vsel %vm277, %v284, %v286
        %v288 = vsel %vm276, %v266, %v269
        %v289 = vsel %vm279, %v275, 1326507024
        %v290 = vsel %vm278, %v272, %v289
        %v291 = vsel %vm277, %v288, %v290
        %v292 = vshll.u32 %v252, 8
        %v293 = vand.u32 %v292, 65535
        %v294 = vshrl.u32 %v292, 16
        %v295 = vand.u32 %v291, 65535
        %v296 = vshrl.u32 %v291, 16
        %v297 = vmul.u32 %v293, %v295
        %v298 = vmul.u32 %v293, %v296
        %v299 = vmul.u32 %v294, %v295
        %v300 = vmul.u32 %v294, %v296
        %v301 = vshll.u32 %v298, 16
        %v302 = vshrl.u32 %v298, 16
        %v303 = vshll.u32 %v299, 16
        %v304 = vshrl.u32 %v299, 16
        %vm305 = vc.u32 %v297, %v301
        %v306 = vsel %vm305, 1, 0
        %v307 = vadd.s32 %v297, %v301
        %v308 = vadd.s32 %v300, %v306
        %vm309 = vc.u32 %v307, %v303
        %v310 = vsel %vm309, 1, 0
        %v311 = vadd.s32 %v307, %v303
        %v312 = vadd.s32 %v308, %v310
        %v313 = vadd.s32 %v312, %v302
        %v314 = vadd.s32 %v313, %v304
        %v315 = vand.u32 %v292, 65535
        %v316 = vshrl.u32 %v292, 16
        %v317 = vand.u32 %v287, 65535
        %v318 = vshrl.u32 %v287, 16
        %v319 = vmul.u32 %v315, %v317
        %v320 = vmul.u32 %v315, %v318
        %v321 = vmul.u32 %v316, %v317
        %v322 = vmul.u32 %v316, %v318
        %v323 = vshll.u32 %v320, 16
        %v324 = vshrl.u32 %v320, 16
        %v325 = vshll.u32 %v321, 16
        %v326 = vshrl.u32 %v321, 16
        %vm327 = vc.u32 %v319, %v323
        %v328 = vsel %vm327, 1, 0
        %v329 = vadd.s32 %v319, %v323
        %v330 = vadd.s32 %v322, %v328
        %vm331 = vc.u32 %v329, %v325
        %v332 = vsel %vm331, 1, 0
        %v333 = vadd.s32 %v329, %v325
        %v334 = vadd.s32 %v330, %v332
        %v335 = vadd.s32 %v334, %v324
        %v336 = vadd.s32 %v335, %v326
        %v337 = vmul.u32 %v292, %v283
        %v338 = vadd.s32 %v314, %v333
        %vm339 = vc.u32 %v314, %v333
        %v340 = vadd.s32 %v336, 1
        %v341 = vsel %vm339, %v340, %v336
        %v342 = vadd.s32 %v337, %v341
        %v343 = vadd.s32 %v342, 536870912
        %v344 = vshrl.u32 %v343, 30
        %v345 = vshll.u32 %v344, 30
        %v346 = vsub.s32 %v342, %v345
        %vm347 = vcmp.lt.s32.totalorder %v346, 0
        %v348 = vsub.s32 0, %v346
        %v349 = vsel %vm347, %v348, %v346
        %v350 = vclz %v349
        %v351 = vsub.s32 %v350, 2
        %vm352 = vcmp.gt.s32.totalorder 0, %v351
        %v353 = vsel %vm352, 0, %v351
        %v354 = vsub.s32 32, %v353
        %v355 = vshll.u32 %v346, %v353
        %v356 = vshrl.u32 %v338, %v354
        %v357 = vor.u32 %v355, %v356
        %v358 = vsub.s32 4294967266, %v353
        %v359 = vadd.s32 %v358, 127
        %v360 = vshll.u32 %v359, 23
        %v361 = vor.u32 4788187, %v360
        %v362 = vand.u32 2147483647, %v361
        %v364 = vcvt.s32.f32 %v357
        %v365 = vmul.f32 %v364, %v362
        %v366 = vxor.u32 %v365, 2147483648
        %v367 = vsel %vm246, %v366, %v365
        %v368 = vsub.s32 4, %v344
        %v369 = vsel %vm246, %v368, %v344
        %v370 = vsel %vm245, %v243, %v367
        %v371 = vsel %vm245, 0, %v369
        %v372 = vmul.f32 %v370, %v370
        %v373 = vmul.f32 %v372, -0.001358992
        %v374 = vadd.f32 %v373, 0.041655596
        %v375 = vmul.f32 %v372, %v374
        %v376 = vadd.f32 %v375, -0.4999988
        %v377 = vmul.f32 %v372, %v376
        %v378 = vadd.f32 1.0, %v377
        %v379 = vmul.f32 %v370, %v370
        %v380 = vmul.f32 %v379, -0.00019511016
        %v381 = vadd.f32 %v380, 0.008332121
        %v382 = vmul.f32 %v379, %v381
        %v383 = vadd.f32 %v382, -0.16666654
        %v384 = vmul.f32 %v379, %v383
        %v385 = vadd.f32 %v384, 1.0
        %v386 = vmul.f32 %v385, %v370
        %vm387 = vweird.f32 %v243
        %v388 = vand.u32 %v371, 3
        %vm389 = vcmp.lt.s32.totalorder %v388, 2
        %vm390 = vcmp.eq.s32.totalorder %v388, 0
        %v391 = vxor.u32 %v386, 2147483648
        %v392 = vsel %vm390, %v378, %v391
        %vm393 = vcmp.eq.s32.totalorder %v388, 2
        %v394 = vxor.u32 %v378, 2147483648
        %v395 = vsel %vm393, %v394, %v386
        %v396 = vsel %vm389, %v392, %v395
        %v397 = vsel %vm387, nan, %v396
        %v398 = vmul.f32 %v242, %v397
        %v399 = vand.u32 2147483647, %v243
        %vm400 = vcmp.le.f32.partialorder %v399, 0.7853982
        %vm401 = vcmp.lt.s32.totalorder %v243, 0
        %v402 = vand.u32 %v243, 2139095040
        %v403 = vshrl.u32 %v402, 23
        %v404 = vsub.s32 %v403, 127
        %v405 = vand.u32 2147483647, %v243
        %v406 = vand.u32 %v405, 8388607
        %v407 = vor.u32 %v406, 8388608
        %v408 = vsub.s32 0, %v407
        %v409 = vadd.s32 %v404, 1
        %vm410 = vcmp.gt.s32.totalorder %v409, 0
        %v411 = vsel %vm410, %v409, 0
        %v412 = vshrl.u32 %v411, 5
        %v413 = vand.u32 %v411, 31
        %v414 = vsub.s32 32, %v413
        %v415 = vshrl.u32 683565275, %v414
        %v416 = vshll.u32 683565275, %v413
        %v417 = vshrl.u32 2475754826, %v414
        %v418 = vor.u32 %v416, %v417
        %v419 = vshll.u32 2475754826, %v413
        %v420 = vshrl.u32 2131351028, %v414
        %v421 = vor.u32 %v419, %v420
        %v422 = vshll.u32 2131351028, %v413
        %v423 = vshrl.u32 2102212464, %v414
        %v424 = vor.u32 %v422, %v423
        %v425 = vshll.u32 2102212464, %v413
        %v426 = vshrl.u32 920167782, %v414
        %v427 = vor.u32 %v425, %v426
        %v428 = vshll.u32 920167782, %v413
        %v429 = vshrl.u32 1326507024, %v414
        %v430 = vor.u32 %v428, %v429
        %vm431 = vcmp.lt.s32.totalorder %v412, 1
        %vm432 = vcmp.lt.s32.totalorder %v412, 2
        %vm433 = vcmp.lt.s32.totalorder %v412, 3
        %vm434 = vcmp.lt.s32.totalorder %v412, 4
        %v435 = vsel %vm431, %v415, %v418
        %v436 = vsel %vm434, %v424, 2102212464
        %v437 = vsel %vm433, %v421, %v436
        %v438 = vsel %vm432, %v435, %v437
        %v439 = vsel %vm431, %v418, %v421
        %v440 = vsel %vm434, %v427, 920167782
        %v441 = vsel %vm433, %v424, %v440
        %v442 = vsel %vm432, %v439, %v441
        %v443 = vsel %vm431, %v421, %v424
        %v444 = vsel %vm434, %v430, 1326507024
        %v445 = vsel %vm433, %v427, %v444
        %v446 = vsel %vm432, %v443, %v445
        %v447 = vshll.u32 %v407, 8
        %v448 = vand.u32 %v447, 65535
        %v449 = vshrl.u32 %v447, 16
        %v450 = vand.u32 %v446, 65535
        %v451 = vshrl.u32 %v446, 16
        %v452 = vmul.u32 %v448, %v450
        %v453 = vmul.u32 %v448, %v451
        %v454 = vmul.u32 %v449, %v450
        %v455 = vmul.u32 %v449, %v451
        %v456 = vshll.u32 %v453, 16
        %v457 = vshrl.u32 %v453, 16
        %v458 = vshll.u32 %v454, 16
        %v459 = vshrl.u32 %v454, 16
        %vm460 = vc.u32 %v452, %v456
        %v461 = vsel %vm460, 1, 0
        %v462 = vadd.s32 %v452, %v456
        %v463 = vadd.s32 %v455, %v461
        %vm464 = vc.u32 %v462, %v458
        %v465 = vsel %vm464, 1, 0
        %v466 = vadd.s32 %v462, %v458
        %v467 = vadd.s32 %v463, %v465
        %v468 = vadd.s32 %v467, %v457
        %v469 = vadd.s32 %v468, %v459
        %v470 = vand.u32 %v447, 65535
        %v471 = vshrl.u32 %v447, 16
        %v472 = vand.u32 %v442, 65535
        %v473 = vshrl.u32 %v442, 16
        %v474 = vmul.u32 %v470, %v472
        %v475 = vmul.u32 %v470, %v473
        %v476 = vmul.u32 %v471, %v472
        %v477 = vmul.u32 %v471, %v473
        %v478 = vshll.u32 %v475, 16
        %v479 = vshrl.u32 %v475, 16
        %v480 = vshll.u32 %v476, 16
        %v481 = vshrl.u32 %v476, 16
        %vm482 = vc.u32 %v474, %v478
        %v483 = vsel %vm482, 1, 0
        %v484 = vadd.s32 %v474, %v478
        %v485 = vadd.s32 %v477, %v483
        %vm486 = vc.u32 %v484, %v480
        %v487 = vsel %vm486, 1, 0
        %v488 = vadd.s32 %v484, %v480
        %v489 = vadd.s32 %v485, %v487
        %v490 = vadd.s32 %v489, %v479
        %v491 = vadd.s32 %v490, %v481
        %v492 = vmul.u32 %v447, %v438
        %v493 = vadd.s32 %v469, %v488
        %vm494 = vc.u32 %v469, %v488
        %v495 = vadd.s32 %v491, 1
        %v496 = vsel %vm494, %v495, %v491
        %v497 = vadd.s32 %v492, %v496
        %v498 = vadd.s32 %v497, 536870912
        %v499 = vshrl.u32 %v498, 30
        %v500 = vshll.u32 %v499, 30
        %v501 = vsub.s32 %v497, %v500
        %vm502 = vcmp.lt.s32.totalorder %v501, 0
        %v503 = vsub.s32 0, %v501
        %v504 = vsel %vm502, %v503, %v501
        %v505 = vclz %v504
        %v506 = vsub.s32 %v505, 2
        %vm507 = vcmp.gt.s32.totalorder 0, %v506
        %v508 = vsel %vm507, 0, %v506
        %v509 = vsub.s32 32, %v508
        %v510 = vshll.u32 %v501, %v508
        %v511 = vshrl.u32 %v493, %v509
        %v512 = vor.u32 %v510, %v511
        %v513 = vsub.s32 4294967266, %v508
        %v514 = vadd.s32 %v513, 127
        %v515 = vshll.u32 %v514, 23
        %v516 = vor.u32 4788187, %v515
        %v517 = vand.u32 2147483647, %v516
        %v519 = vcvt.s32.f32 %v512
        %v520 = vmul.f32 %v519, %v517
        %v521 = vxor.u32 %v520, 2147483648
        %v522 = vsel %vm401, %v521, %v520
        %v523 = vsub.s32 4, %v499
        %v524 = vsel %vm401, %v523, %v499
        %v525 = vsel %vm400, %v243, %v522
        %v526 = vsel %vm400, 0, %v524
        %v527 = vmul.f32 %v525, %v525
        %v528 = vmul.f32 %v527, -0.001358992
        %v529 = vadd.f32 %v528, 0.041655596
        %v530 = vmul.f32 %v527, %v529
        %v531 = vadd.f32 %v530, -0.4999988
        %v532 = vmul.f32 %v527, %v531
        %v533 = vadd.f32 1.0, %v532
        %v534 = vmul.f32 %v525, %v525
        %v535 = vmul.f32 %v534, -0.00019511016
        %v536 = vadd.f32 %v535, 0.008332121
        %v537 = vmul.f32 %v534, %v536
        %v538 = vadd.f32 %v537, -0.16666654
        %v539 = vmul.f32 %v534, %v538
        %v540 = vadd.f32 %v539, 1.0
        %v541 = vmul.f32 %v540, %v525
        %vm542 = vweird.f32 %v243
        %v543 = vadd.s32 %v526, 3
        %v544 = vand.u32 %v543, 3
        %vm545 = vcmp.lt.s32.totalorder %v544, 2
        %vm546 = vcmp.eq.s32.totalorder %v544, 0
        %v547 = vxor.u32 %v541, 2147483648
        %v548 = vsel %vm546, %v533, %v547
        %vm549 = vcmp.eq.s32.totalorder %v544, 2
        %v550 = vxor.u32 %v533, 2147483648
        %v551 = vsel %vm549, %v550, %v541
        %v552 = vsel %vm545, %v548, %v551
        %v553 = vsel %vm542, nan, %v552
        %v554 = vmul.f32 %v242, %v553
        %v555 = vmul.f32 %v239, -18.849556
        %v556 = vmul.f32 %v555, 1.442695
        %v557 = vpow.pop %v556
        %v558 = vmul.f32 %v238, 18.849556
        %v559 = vand.u32 2147483647, %v558
        %vm560 = vcmp.le.f32.partialorder %v559, 0.7853982
        %vm561 = vcmp.lt.s32.totalorder %v558, 0
        %v562 = vand.u32 %v558, 2139095040
        %v563 = vshrl.u32 %v562, 23
        %v564 = vsub.s32 %v563, 127
        %v565 = vand.u32 2147483647, %v558
        %v566 = vand.u32 %v565, 8388607
        %v567 = vor.u32 %v566, 8388608
        %v568 = vsub.s32 0, %v567
        %v569 = vadd.s32 %v564, 1
        %vm570 = vcmp.gt.s32.totalorder %v569, 0
        %v571 = vsel %vm570, %v569, 0
        %v572 = vshrl.u32 %v571, 5
        %v573 = vand.u32 %v571, 31
        %v574 = vsub.s32 32, %v573
        %v575 = vshrl.u32 683565275, %v574
        %v576 = vshll.u32 683565275, %v573
        %v577 = vshrl.u32 2475754826, %v574
        %v578 = vor.u32 %v576, %v577
        %v579 = vshll.u32 2475754826, %v573
        %v580 = vshrl.u32 2131351028, %v574
        %v581 = vor.u32 %v579, %v580
        %v582 = vshll.u32 2131351028, %v573
        %v583 = vshrl.u32 2102212464, %v574
        %v584 = vor.u32 %v582, %v583
        %v585 = vshll.u32 2102212464, %v573
        %v586 = vshrl.u32 920167782, %v574
        %v587 = vor.u32 %v585, %v586
        %v588 = vshll.u32 920167782, %v573
        %v589 = vshrl.u32 1326507024, %v574
        %v590 = vor.u32 %v588, %v589
        %vm591 = vcmp.lt.s32.totalorder %v572, 1
        %vm592 = vcmp.lt.s32.totalorder %v572, 2
        %vm593 = vcmp.lt.s32.totalorder %v572, 3
        %vm594 = vcmp.lt.s32.totalorder %v572, 4
        %v595 = vsel %vm591, %v575, %v578
        %v596 = vsel %vm594, %v584, 2102212464
        %v597 = vsel %vm593, %v581, %v596
        %v598 = vsel %vm592, %v595, %v597
        %v599 = vsel %vm591, %v578, %v581
        %v600 = vsel %vm594, %v587, 920167782
        %v601 = vsel %vm593, %v584, %v600
        %v602 = vsel %vm592, %v599, %v601
        %v603 = vsel %vm591, %v581, %v584
        %v604 = vsel %vm594, %v590, 1326507024
        %v605 = vsel %vm593, %v587, %v604
        %v606 = vsel %vm592, %v603, %v605
        %v607 = vshll.u32 %v567, 8
        %v608 = vand.u32 %v607, 65535
        %v609 = vshrl.u32 %v607, 16
        %v610 = vand.u32 %v606, 65535
        %v611 = vshrl.u32 %v606, 16
        %v612 = vmul.u32 %v608, %v610
        %v613 = vmul.u32 %v608, %v611
        %v614 = vmul.u32 %v609, %v610
        %v615 = vmul.u32 %v609, %v611
        %v616 = vshll.u32 %v613, 16
        %v617 = vshrl.u32 %v613, 16
        %v618 = vshll.u32 %v614, 16
        %v619 = vshrl.u32 %v614, 16
        %vm620 = vc.u32 %v612, %v616
        %v621 = vsel %vm620, 1, 0
        %v622 = vadd.s32 %v612, %v616
        %v623 = vadd.s32 %v615, %v621
        %vm624 = vc.u32 %v622, %v618
        %v625 = vsel %vm624, 1, 0
        %v626 = vadd.s32 %v622, %v618
        %v627 = vadd.s32 %v623, %v625
        %v628 = vadd.s32 %v627, %v617
        %v629 = vadd.s32 %v628, %v619
        %v630 = vand.u32 %v607, 65535
        %v631 = vshrl.u32 %v607, 16
        %v632 = vand.u32 %v602, 65535
        %v633 = vshrl.u32 %v602, 16
        %v634 = vmul.u32 %v630, %v632
        %v635 = vmul.u32 %v630, %v633
        %v636 = vmul.u32 %v631, %v632
        %v637 = vmul.u32 %v631, %v633
        %v638 = vshll.u32 %v635, 16
        %v639 = vshrl.u32 %v635, 16
        %v640 = vshll.u32 %v636, 16
        %v641 = vshrl.u32 %v636, 16
        %vm642 = vc.u32 %v634, %v638
        %v643 = vsel %vm642, 1, 0
        %v644 = vadd.s32 %v634, %v638
        %v645 = vadd.s32 %v637, %v643
        %vm646 = vc.u32 %v644, %v640
        %v647 = vsel %vm646, 1, 0
        %v648 = vadd.s32 %v644, %v640
        %v649 = vadd.s32 %v645, %v647
        %v650 = vadd.s32 %v649, %v639
        %v651 = vadd.s32 %v650, %v641
        %v652 = vmul.u32 %v607, %v598
        %v653 = vadd.s32 %v629, %v648
        %vm654 = vc.u32 %v629, %v648
        %v655 = vadd.s32 %v651, 1
        %v656 = vsel %vm654, %v655, %v651
        %v657 = vadd.s32 %v652, %v656
        %v658 = vadd.s32 %v657, 536870912
        %v659 = vshrl.u32 %v658, 30
        %v660 = vshll.u32 %v659, 30
        %v661 = vsub.s32 %v657, %v660
        %vm662 = vcmp.lt.s32.totalorder %v661, 0
        %v663 = vsub.s32 0, %v661
        %v664 = vsel %vm662, %v663, %v661
        %v665 = vclz %v664
        %v666 = vsub.s32 %v665, 2
        %vm667 = vcmp.gt.s32.totalorder 0, %v666
        %v668 = vsel %vm667, 0, %v666
        %v669 = vsub.s32 32, %v668
        %v670 = vshll.u32 %v661, %v668
        %v671 = vshrl.u32 %v653, %v669
        %v672 = vor.u32 %v670, %v671
        %v673 = vsub.s32 4294967266, %v668
        %v674 = vadd.s32 %v673, 127
        %v675 = vshll.u32 %v674, 23
        %v676 = vor.u32 4788187, %v675
        %v677 = vand.u32 2147483647, %v676
        %v679 = vcvt.s32.f32 %v672
        %v680 = vmul.f32 %v679, %v677
        %v681 = vxor.u32 %v680, 2147483648
        %v682 = vsel %vm561, %v681, %v680
        %v683 = vsub.s32 4, %v659
        %v684 = vsel %vm561, %v683, %v659
        %v685 = vsel %vm560, %v558, %v682
        %v686 = vsel %vm560, 0, %v684
        %v687 = vmul.f32 %v685, %v685
        %v688 = vmul.f32 %v687, -0.001358992
        %v689 = vadd.f32 %v688, 0.041655596
        %v690 = vmul.f32 %v687, %v689
        %v691 = vadd.f32 %v690, -0.4999988
        %v692 = vmul.f32 %v687, %v691
        %v693 = vadd.f32 1.0, %v692
        %v694 = vmul.f32 %v685, %v685
        %v695 = vmul.f32 %v694, -0.00019511016
        %v696 = vadd.f32 %v695, 0.008332121
        %v697 = vmul.f32 %v694, %v696
        %v698 = vadd.f32 %v697, -0.16666654
        %v699 = vmul.f32 %v694, %v698
        %v700 = vadd.f32 %v699, 1.0
        %v701 = vmul.f32 %v700, %v685
        %vm702 = vweird.f32 %v558
        %v703 = vand.u32 %v686, 3
        %vm704 = vcmp.lt.s32.totalorder %v703, 2
        %vm705 = vcmp.eq.s32.totalorder %v703, 0
        %v706 = vxor.u32 %v701, 2147483648
        %v707 = vsel %vm705, %v693, %v706
        %vm708 = vcmp.eq.s32.totalorder %v703, 2
        %v709 = vxor.u32 %v693, 2147483648
        %v710 = vsel %vm708, %v709, %v701
        %v711 = vsel %vm704, %v707, %v710
        %v712 = vsel %vm702, nan, %v711
        %v713 = vmul.f32 %v557, %v712
        %v714 = vand.u32 2147483647, %v558
        %vm715 = vcmp.le.f32.partialorder %v714, 0.7853982
        %vm716 = vcmp.lt.s32.totalorder %v558, 0
        %v717 = vand.u32 %v558, 2139095040
        %v718 = vshrl.u32 %v717, 23
        %v719 = vsub.s32 %v718, 127
        %v720 = vand.u32 2147483647, %v558
        %v721 = vand.u32 %v720, 8388607
        %v722 = vor.u32 %v721, 8388608
        %v723 = vsub.s32 0, %v722
        %v724 = vadd.s32 %v719, 1
        %vm725 = vcmp.gt.s32.totalorder %v724, 0
        %v726 = vsel %vm725, %v724, 0
        %v727 = vshrl.u32 %v726, 5
        %v728 = vand.u32 %v726, 31
        %v729 = vsub.s32 32, %v728
        %v730 = vshrl.u32 683565275, %v729
        %v731 = vshll.u32 683565275, %v728
        %v732 = vshrl.u32 2475754826, %v729
        %v733 = vor.u32 %v731, %v732
        %v734 = vshll.u32 2475754826, %v728
        %v735 = vshrl.u32 2131351028, %v729
        %v736 = vor.u32 %v734, %v735
        %v737 = vshll.u32 2131351028, %v728
        %v738 = vshrl.u32 2102212464, %v729
        %v739 = vor.u32 %v737, %v738
        %v740 = vshll.u32 2102212464, %v728
        %v741 = vshrl.u32 920167782, %v729
        %v742 = vor.u32 %v740, %v741
        %v743 = vshll.u32 920167782, %v728
        %v744 = vshrl.u32 1326507024, %v729
        %v745 = vor.u32 %v743, %v744
        %vm746 = vcmp.lt.s32.totalorder %v727, 1
        %vm747 = vcmp.lt.s32.totalorder %v727, 2
        %vm748 = vcmp.lt.s32.totalorder %v727, 3
        %vm749 = vcmp.lt.s32.totalorder %v727, 4
        %v750 = vsel %vm746, %v730, %v733
        %v751 = vsel %vm749, %v739, 2102212464
        %v752 = vsel %vm748, %v736, %v751
        %v753 = vsel %vm747, %v750, %v752
        %v754 = vsel %vm746, %v733, %v736
        %v755 = vsel %vm749, %v742, 920167782
        %v756 = vsel %vm748, %v739, %v755
        %v757 = vsel %vm747, %v754, %v756
        %v758 = vsel %vm746, %v736, %v739
        %v759 = vsel %vm749, %v745, 1326507024
        %v760 = vsel %vm748, %v742, %v759
        %v761 = vsel %vm747, %v758, %v760
        %v762 = vshll.u32 %v722, 8
        %v763 = vand.u32 %v762, 65535
        %v764 = vshrl.u32 %v762, 16
        %v765 = vand.u32 %v761, 65535
        %v766 = vshrl.u32 %v761, 16
        %v767 = vmul.u32 %v763, %v765
        %v768 = vmul.u32 %v763, %v766
        %v769 = vmul.u32 %v764, %v765
        %v770 = vmul.u32 %v764, %v766
        %v771 = vshll.u32 %v768, 16
        %v772 = vshrl.u32 %v768, 16
        %v773 = vshll.u32 %v769, 16
        %v774 = vshrl.u32 %v769, 16
        %vm775 = vc.u32 %v767, %v771
        %v776 = vsel %vm775, 1, 0
        %v777 = vadd.s32 %v767, %v771
        %v778 = vadd.s32 %v770, %v776
        %vm779 = vc.u32 %v777, %v773
        %v780 = vsel %vm779, 1, 0
        %v781 = vadd.s32 %v777, %v773
        %v782 = vadd.s32 %v778, %v780
        %v783 = vadd.s32 %v782, %v772
        %v784 = vadd.s32 %v783, %v774
        %v785 = vand.u32 %v762, 65535
        %v786 = vshrl.u32 %v762, 16
        %v787 = vand.u32 %v757, 65535
        %v788 = vshrl.u32 %v757, 16
        %v789 = vmul.u32 %v785, %v787
        %v790 = vmul.u32 %v785, %v788
        %v791 = vmul.u32 %v786, %v787
        %v792 = vmul.u32 %v786, %v788
        %v793 = vshll.u32 %v790, 16
        %v794 = vshrl.u32 %v790, 16
        %v795 = vshll.u32 %v791, 16
        %v796 = vshrl.u32 %v791, 16
        %vm797 = vc.u32 %v789, %v793
        %v798 = vsel %vm797, 1, 0
        %v799 = vadd.s32 %v789, %v793
        %v800 = vadd.s32 %v792, %v798
        %vm801 = vc.u32 %v799, %v795
        %v802 = vsel %vm801, 1, 0
        %v803 = vadd.s32 %v799, %v795
        %v804 = vadd.s32 %v800, %v802
        %v805 = vadd.s32 %v804, %v794
        %v806 = vadd.s32 %v805, %v796
        %v807 = vmul.u32 %v762, %v753
        %v808 = vadd.s32 %v784, %v803
        %vm809 = vc.u32 %v784, %v803
        %v810 = vadd.s32 %v806, 1
        %v811 = vsel %vm809, %v810, %v806
        %v812 = vadd.s32 %v807, %v811
        %v813 = vadd.s32 %v812, 536870912
        %v814 = vshrl.u32 %v813, 30
        %v815 = vshll.u32 %v814, 30
        %v816 = vsub.s32 %v812, %v815
        %vm817 = vcmp.lt.s32.totalorder %v816, 0
        %v818 = vsub.s32 0, %v816
        %v819 = vsel %vm817, %v818, %v816
        %v820 = vclz %v819
        %v821 = vsub.s32 %v820, 2
        %vm822 = vcmp.gt.s32.totalorder 0, %v821
        %v823 = vsel %vm822, 0, %v821
        %v824 = vsub.s32 32, %v823
        %v825 = vshll.u32 %v816, %v823
        %v826 = vshrl.u32 %v808, %v824
        %v827 = vor.u32 %v825, %v826
        %v828 = vsub.s32 4294967266, %v823
        %v829 = vadd.s32 %v828, 127
        %v830 = vshll.u32 %v829, 23
        %v831 = vor.u32 4788187, %v830
        %v832 = vand.u32 2147483647, %v831
        %v834 = vcvt.s32.f32 %v827
        %v835 = vmul.f32 %v834, %v832
        %v836 = vxor.u32 %v835, 2147483648
        %v837 = vsel %vm716, %v836, %v835
        %v838 = vsub.s32 4, %v814
        %v839 = vsel %vm716, %v838, %v814
        %v840 = vsel %vm715, %v558, %v837
        %v841 = vsel %vm715, 0, %v839
        %v842 = vmul.f32 %v840, %v840
        %v843 = vmul.f32 %v842, -0.001358992
        %v844 = vadd.f32 %v843, 0.041655596
        %v845 = vmul.f32 %v842, %v844
        %v846 = vadd.f32 %v845, -0.4999988
        %v847 = vmul.f32 %v842, %v846
        %v848 = vadd.f32 1.0, %v847
        %v849 = vmul.f32 %v840, %v840
        %v850 = vmul.f32 %v849, -0.00019511016
        %v851 = vadd.f32 %v850, 0.008332121
        %v852 = vmul.f32 %v849, %v851
        %v853 = vadd.f32 %v852, -0.16666654
        %v854 = vmul.f32 %v849, %v853
        %v855 = vadd.f32 %v854, 1.0
        %v856 = vmul.f32 %v855, %v840
        %vm857 = vweird.f32 %v558
        %v858 = vadd.s32 %v841, 3
        %v859 = vand.u32 %v858, 3
        %vm860 = vcmp.lt.s32.totalorder %v859, 2
        %vm861 = vcmp.eq.s32.totalorder %v859, 0
        %v862 = vxor.u32 %v856, 2147483648
        %v863 = vsel %vm861, %v848, %v862
        %vm864 = vcmp.eq.s32.totalorder %v859, 2
        %v865 = vxor.u32 %v848, 2147483648
        %v866 = vsel %vm864, %v865, %v856
        %v867 = vsel %vm860, %v863, %v866
        %v868 = vsel %vm857, nan, %v867
        %v869 = vmul.f32 %v557, %v868
        %v870 = vmul.f32 %v239, -12.566371
        %v871 = vmul.f32 %v870, 1.442695
        %v872 = vpow.pop %v871
        %v873 = vmul.f32 %v238, 12.566371
        %v874 = vand.u32 2147483647, %v873
        %vm875 = vcmp.le.f32.partialorder %v874, 0.7853982
        %vm876 = vcmp.lt.s32.totalorder %v873, 0
        %v877 = vand.u32 %v873, 2139095040
        %v878 = vshrl.u32 %v877, 23
        %v879 = vsub.s32 %v878, 127
        %v880 = vand.u32 2147483647, %v873
        %v881 = vand.u32 %v880, 8388607
        %v882 = vor.u32 %v881, 8388608
        %v883 = vsub.s32 0, %v882
        %v884 = vadd.s32 %v879, 1
        %vm885 = vcmp.gt.s32.totalorder %v884, 0
        %v886 = vsel %vm885, %v884, 0
        %v887 = vshrl.u32 %v886, 5
        %v888 = vand.u32 %v886, 31
        %v889 = vsub.s32 32, %v888
        %v890 = vshrl.u32 683565275, %v889
        %v891 = vshll.u32 683565275, %v888
        %v892 = vshrl.u32 2475754826, %v889
        %v893 = vor.u32 %v891, %v892
        %v894 = vshll.u32 2475754826, %v888
        %v895 = vshrl.u32 2131351028, %v889
        %v896 = vor.u32 %v894, %v895
        %v897 = vshll.u32 2131351028, %v888
        %v898 = vshrl.u32 2102212464, %v889
        %v899 = vor.u32 %v897, %v898
        %v900 = vshll.u32 2102212464, %v888
        %v901 = vshrl.u32 920167782, %v889
        %v902 = vor.u32 %v900, %v901
        %v903 = vshll.u32 920167782, %v888
        %v904 = vshrl.u32 1326507024, %v889
        %v905 = vor.u32 %v903, %v904
        %vm906 = vcmp.lt.s32.totalorder %v887, 1
        %vm907 = vcmp.lt.s32.totalorder %v887, 2
        %vm908 = vcmp.lt.s32.totalorder %v887, 3
        %vm909 = vcmp.lt.s32.totalorder %v887, 4
        %v910 = vsel %vm906, %v890, %v893
        %v911 = vsel %vm909, %v899, 2102212464
        %v912 = vsel %vm908, %v896, %v911
        %v913 = vsel %vm907, %v910, %v912
        %v914 = vsel %vm906, %v893, %v896
        %v915 = vsel %vm909, %v902, 920167782
        %v916 = vsel %vm908, %v899, %v915
        %v917 = vsel %vm907, %v914, %v916
        %v918 = vsel %vm906, %v896, %v899
        %v919 = vsel %vm909, %v905, 1326507024
        %v920 = vsel %vm908, %v902, %v919
        %v921 = vsel %vm907, %v918, %v920
        %v922 = vshll.u32 %v882, 8
        %v923 = vand.u32 %v922, 65535
        %v924 = vshrl.u32 %v922, 16
        %v925 = vand.u32 %v921, 65535
        %v926 = vshrl.u32 %v921, 16
        %v927 = vmul.u32 %v923, %v925
        %v928 = vmul.u32 %v923, %v926
        %v929 = vmul.u32 %v924, %v925
        %v930 = vmul.u32 %v924, %v926
        %v931 = vshll.u32 %v928, 16
        %v932 = vshrl.u32 %v928, 16
        %v933 = vshll.u32 %v929, 16
        %v934 = vshrl.u32 %v929, 16
        %vm935 = vc.u32 %v927, %v931
        %v936 = vsel %vm935, 1, 0
        %v937 = vadd.s32 %v927, %v931
        %v938 = vadd.s32 %v930, %v936
        %vm939 = vc.u32 %v937, %v933
        %v940 = vsel %vm939, 1, 0
        %v941 = vadd.s32 %v937, %v933
        %v942 = vadd.s32 %v938, %v940
        %v943 = vadd.s32 %v942, %v932
        %v944 = vadd.s32 %v943, %v934
        %v945 = vand.u32 %v922, 65535
        %v946 = vshrl.u32 %v922, 16
        %v947 = vand.u32 %v917, 65535
        %v948 = vshrl.u32 %v917, 16
        %v949 = vmul.u32 %v945, %v947
        %v950 = vmul.u32 %v945, %v948
        %v951 = vmul.u32 %v946, %v947
        %v952 = vmul.u32 %v946, %v948
        %v953 = vshll.u32 %v950, 16
        %v954 = vshrl.u32 %v950, 16
        %v955 = vshll.u32 %v951, 16
        %v956 = vshrl.u32 %v951, 16
        %vm957 = vc.u32 %v949, %v953
        %v958 = vsel %vm957, 1, 0
        %v959 = vadd.s32 %v949, %v953
        %v960 = vadd.s32 %v952, %v958
        %vm961 = vc.u32 %v959, %v955
        %v962 = vsel %vm961, 1, 0
        %v963 = vadd.s32 %v959, %v955
        %v964 = vadd.s32 %v960, %v962
        %v965 = vadd.s32 %v964, %v954
        %v966 = vadd.s32 %v965, %v956
        %v967 = vmul.u32 %v922, %v913
        %v968 = vadd.s32 %v944, %v963
        %vm969 = vc.u32 %v944, %v963
        %v970 = vadd.s32 %v966, 1
        %v971 = vsel %vm969, %v970, %v966
        %v972 = vadd.s32 %v967, %v971
        %v973 = vadd.s32 %v972, 536870912
        %v974 = vshrl.u32 %v973, 30
        %v975 = vshll.u32 %v974, 30
        %v976 = vsub.s32 %v972, %v975
        %vm977 = vcmp.lt.s32.totalorder %v976, 0
        %v978 = vsub.s32 0, %v976
        %v979 = vsel %vm977, %v978, %v976
        %v980 = vclz %v979
        %v981 = vsub.s32 %v980, 2
        %vm982 = vcmp.gt.s32.totalorder 0, %v981
        %v983 = vsel %vm982, 0, %v981
        %v984 = vsub.s32 32, %v983
        %v985 = vshll.u32 %v976, %v983
        %v986 = vshrl.u32 %v968, %v984
        %v987 = vor.u32 %v985, %v986
        %v988 = vsub.s32 4294967266, %v983
        %v989 = vadd.s32 %v988, 127
        %v990 = vshll.u32 %v989, 23
        %v991 = vor.u32 4788187, %v990
        %v992 = vand.u32 2147483647, %v991
        %v994 = vcvt.s32.f32 %v987
        %v995 = vmul.f32 %v994, %v992
        %v996 = vxor.u32 %v995, 2147483648
        %v997 = vsel %vm876, %v996, %v995
        %v998 = vsub.s32 4, %v974
        %v999 = vsel %vm876, %v998, %v974
        %v1000 = vsel %vm875, %v873, %v997
        %v1001 = vsel %vm875, 0, %v999
        %v1002 = vmul.f32 %v1000, %v1000
        %v1003 = vmul.f32 %v1002, -0.001358992
        %v1004 = vadd.f32 %v1003, 0.041655596
        %v1005 = vmul.f32 %v1002, %v1004
        %v1006 = vadd.f32 %v1005, -0.4999988
        %v1007 = vmul.f32 %v1002, %v1006
        %v1008 = vadd.f32 1.0, %v1007
        %v1009 = vmul.f32 %v1000, %v1000
        %v1010 = vmul.f32 %v1009, -0.00019511016
        %v1011 = vadd.f32 %v1010, 0.008332121
        %v1012 = vmul.f32 %v1009, %v1011
        %v1013 = vadd.f32 %v1012, -0.16666654
        %v1014 = vmul.f32 %v1009, %v1013
        %v1015 = vadd.f32 %v1014, 1.0
        %v1016 = vmul.f32 %v1015, %v1000
        %vm1017 = vweird.f32 %v873
        %v1018 = vand.u32 %v1001, 3
        %vm1019 = vcmp.lt.s32.totalorder %v1018, 2
        %vm1020 = vcmp.eq.s32.totalorder %v1018, 0
        %v1021 = vxor.u32 %v1016, 2147483648
        %v1022 = vsel %vm1020, %v1008, %v1021
        %vm1023 = vcmp.eq.s32.totalorder %v1018, 2
        %v1024 = vxor.u32 %v1008, 2147483648
        %v1025 = vsel %vm1023, %v1024, %v1016
        %v1026 = vsel %vm1019, %v1022, %v1025
        %v1027 = vsel %vm1017, nan, %v1026
        %v1028 = vmul.f32 %v872, %v1027
        %v1029 = vand.u32 2147483647, %v873
        %vm1030 = vcmp.le.f32.partialorder %v1029, 0.7853982
        %vm1031 = vcmp.lt.s32.totalorder %v873, 0
        %v1032 = vand.u32 %v873, 2139095040
        %v1033 = vshrl.u32 %v1032, 23
        %v1034 = vsub.s32 %v1033, 127
        %v1035 = vand.u32 2147483647, %v873
        %v1036 = vand.u32 %v1035, 8388607
        %v1037 = vor.u32 %v1036, 8388608
        %v1038 = vsub.s32 0, %v1037
        %v1039 = vadd.s32 %v1034, 1
        %vm1040 = vcmp.gt.s32.totalorder %v1039, 0
        %v1041 = vsel %vm1040, %v1039, 0
        %v1042 = vshrl.u32 %v1041, 5
        %v1043 = vand.u32 %v1041, 31
        %v1044 = vsub.s32 32, %v1043
        %v1045 = vshrl.u32 683565275, %v1044
        %v1046 = vshll.u32 683565275, %v1043
        %v1047 = vshrl.u32 2475754826, %v1044
        %v1048 = vor.u32 %v1046, %v1047
        %v1049 = vshll.u32 2475754826, %v1043
        %v1050 = vshrl.u32 2131351028, %v1044
        %v1051 = vor.u32 %v1049, %v1050
        %v1052 = vshll.u32 2131351028, %v1043
        %v1053 = vshrl.u32 2102212464, %v1044
        %v1054 = vor.u32 %v1052, %v1053
        %v1055 = vshll.u32 2102212464, %v1043
        %v1056 = vshrl.u32 920167782, %v1044
        %v1057 = vor.u32 %v1055, %v1056
        %v1058 = vshll.u32 920167782, %v1043
        %v1059 = vshrl.u32 1326507024, %v1044
        %v1060 = vor.u32 %v1058, %v1059
        %vm1061 = vcmp.lt.s32.totalorder %v1042, 1
        %vm1062 = vcmp.lt.s32.totalorder %v1042, 2
        %vm1063 = vcmp.lt.s32.totalorder %v1042, 3
        %vm1064 = vcmp.lt.s32.totalorder %v1042, 4
        %v1065 = vsel %vm1061, %v1045, %v1048
        %v1066 = vsel %vm1064, %v1054, 2102212464
        %v1067 = vsel %vm1063, %v1051, %v1066
        %v1068 = vsel %vm1062, %v1065, %v1067
        %v1069 = vsel %vm1061, %v1048, %v1051
        %v1070 = vsel %vm1064, %v1057, 920167782
        %v1071 = vsel %vm1063, %v1054, %v1070
        %v1072 = vsel %vm1062, %v1069, %v1071
        %v1073 = vsel %vm1061, %v1051, %v1054
        %v1074 = vsel %vm1064, %v1060, 1326507024
        %v1075 = vsel %vm1063, %v1057, %v1074
        %v1076 = vsel %vm1062, %v1073, %v1075
        %v1077 = vshll.u32 %v1037, 8
        %v1078 = vand.u32 %v1077, 65535
        %v1079 = vshrl.u32 %v1077, 16
        %v1080 = vand.u32 %v1076, 65535
        %v1081 = vshrl.u32 %v1076, 16
        %v1082 = vmul.u32 %v1078, %v1080
        %v1083 = vmul.u32 %v1078, %v1081
        %v1084 = vmul.u32 %v1079, %v1080
        %v1085 = vmul.u32 %v1079, %v1081
        %v1086 = vshll.u32 %v1083, 16
        %v1087 = vshrl.u32 %v1083, 16
        %v1088 = vshll.u32 %v1084, 16
        %v1089 = vshrl.u32 %v1084, 16
        %vm1090 = vc.u32 %v1082, %v1086
        %v1091 = vsel %vm1090, 1, 0
        %v1092 = vadd.s32 %v1082, %v1086
        %v1093 = vadd.s32 %v1085, %v1091
        %vm1094 = vc.u32 %v1092, %v1088
        %v1095 = vsel %vm1094, 1, 0
        %v1096 = vadd.s32 %v1092, %v1088
        %v1097 = vadd.s32 %v1093, %v1095
        %v1098 = vadd.s32 %v1097, %v1087
        %v1099 = vadd.s32 %v1098, %v1089
        %v1100 = vand.u32 %v1077, 65535
        %v1101 = vshrl.u32 %v1077, 16
        %v1102 = vand.u32 %v1072, 65535
        %v1103 = vshrl.u32 %v1072, 16
        %v1104 = vmul.u32 %v1100, %v1102
        %v1105 = vmul.u32 %v1100, %v1103
        %v1106 = vmul.u32 %v1101, %v1102
        %v1107 = vmul.u32 %v1101, %v1103
        %v1108 = vshll.u32 %v1105, 16
        %v1109 = vshrl.u32 %v1105, 16
        %v1110 = vshll.u32 %v1106, 16
        %v1111 = vshrl.u32 %v1106, 16
        %vm1112 = vc.u32 %v1104, %v1108
        %v1113 = vsel %vm1112, 1, 0
        %v1114 = vadd.s32 %v1104, %v1108
        %v1115 = vadd.s32 %v1107, %v1113
        %vm1116 = vc.u32 %v1114, %v1110
        %v1117 = vsel %vm1116, 1, 0
        %v1118 = vadd.s32 %v1114, %v1110
        %v1119 = vadd.s32 %v1115, %v1117
        %v1120 = vadd.s32 %v1119, %v1109
        %v1121 = vadd.s32 %v1120, %v1111
        %v1122 = vmul.u32 %v1077, %v1068
        %v1123 = vadd.s32 %v1099, %v1118
        %vm1124 = vc.u32 %v1099, %v1118
        %v1125 = vadd.s32 %v1121, 1
        %v1126 = vsel %vm1124, %v1125, %v1121
        %v1127 = vadd.s32 %v1122, %v1126
        %v1128 = vadd.s32 %v1127, 536870912
        %v1129 = vshrl.u32 %v1128, 30
        %v1130 = vshll.u32 %v1129, 30
        %v1131 = vsub.s32 %v1127, %v1130
        %vm1132 = vcmp.lt.s32.totalorder %v1131, 0
        %v1133 = vsub.s32 0, %v1131
        %v1134 = vsel %vm1132, %v1133, %v1131
        %v1135 = vclz %v1134
        %v1136 = vsub.s32 %v1135, 2
        %vm1137 = vcmp.gt.s32.totalorder 0, %v1136
        %v1138 = vsel %vm1137, 0, %v1136
        %v1139 = vsub.s32 32, %v1138
        %v1140 = vshll.u32 %v1131, %v1138
        %v1141 = vshrl.u32 %v1123, %v1139
        %v1142 = vor.u32 %v1140, %v1141
        %v1143 = vsub.s32 4294967266, %v1138
        %v1144 = vadd.s32 %v1143, 127
        %v1145 = vshll.u32 %v1144, 23
        %v1146 = vor.u32 4788187, %v1145
        %v1147 = vand.u32 2147483647, %v1146
        %v1149 = vcvt.s32.f32 %v1142
        %v1150 = vmul.f32 %v1149, %v1147
        %v1151 = vxor.u32 %v1150, 2147483648
        %v1152 = vsel %vm1031, %v1151, %v1150
        %v1153 = vsub.s32 4, %v1129
        %v1154 = vsel %vm1031, %v1153, %v1129
        %v1155 = vsel %vm1030, %v873, %v1152
        %v1156 = vsel %vm1030, 0, %v1154
        %v1157 = vmul.f32 %v1155, %v1155
        %v1158 = vmul.f32 %v1157, -0.001358992
        %v1159 = vadd.f32 %v1158, 0.041655596
        %v1160 = vmul.f32 %v1157, %v1159
        %v1161 = vadd.f32 %v1160, -0.4999988
        %v1162 = vmul.f32 %v1157, %v1161
        %v1163 = vadd.f32 1.0, %v1162
        %v1164 = vmul.f32 %v1155, %v1155
        %v1165 = vmul.f32 %v1164, -0.00019511016
        %v1166 = vadd.f32 %v1165, 0.008332121
        %v1167 = vmul.f32 %v1164, %v1166
        %v1168 = vadd.f32 %v1167, -0.16666654
        %v1169 = vmul.f32 %v1164, %v1168
        %v1170 = vadd.f32 %v1169, 1.0
        %v1171 = vmul.f32 %v1170, %v1155
        %vm1172 = vweird.f32 %v873
        %v1173 = vadd.s32 %v1156, 3
        %v1174 = vand.u32 %v1173, 3
        %vm1175 = vcmp.lt.s32.totalorder %v1174, 2
        %vm1176 = vcmp.eq.s32.totalorder %v1174, 0
        %v1177 = vxor.u32 %v1171, 2147483648
        %v1178 = vsel %vm1176, %v1163, %v1177
        %vm1179 = vcmp.eq.s32.totalorder %v1174, 2
        %v1180 = vxor.u32 %v1163, 2147483648
        %v1181 = vsel %vm1179, %v1180, %v1171
        %v1182 = vsel %vm1175, %v1178, %v1181
        %v1183 = vsel %vm1172, nan, %v1182
        %v1184 = vmul.f32 %v872, %v1183
        %v1185 = vmul.f32 %v239, -6.2831855
        %v1186 = vmul.f32 %v1185, 1.442695
        %v1187 = vpow.pop %v1186
        %v1188 = vmul.f32 %v238, 6.2831855
        %v1189 = vand.u32 2147483647, %v1188
        %vm1190 = vcmp.le.f32.partialorder %v1189, 0.7853982
        %vm1191 = vcmp.lt.s32.totalorder %v1188, 0
        %v1192 = vand.u32 %v1188, 2139095040
        %v1193 = vshrl.u32 %v1192, 23
        %v1194 = vsub.s32 %v1193, 127
        %v1195 = vand.u32 2147483647, %v1188
        %v1196 = vand.u32 %v1195, 8388607
        %v1197 = vor.u32 %v1196, 8388608
        %v1198 = vsub.s32 0, %v1197
        %v1199 = vadd.s32 %v1194, 1
        %vm1200 = vcmp.gt.s32.totalorder %v1199, 0
        %v1201 = vsel %vm1200, %v1199, 0
        %v1202 = vshrl.u32 %v1201, 5
        %v1203 = vand.u32 %v1201, 31
        %v1204 = vsub.s32 32, %v1203
        %v1205 = vshrl.u32 683565275, %v1204
        %v1206 = vshll.u32 683565275, %v1203
        %v1207 = vshrl.u32 2475754826, %v1204
        %v1208 = vor.u32 %v1206, %v1207
        %v1209 = vshll.u32 2475754826, %v1203
        %v1210 = vshrl.u32 2131351028, %v1204
        %v1211 = vor.u32 %v1209, %v1210
        %v1212 = vshll.u32 2131351028, %v1203
        %v1213 = vshrl.u32 2102212464, %v1204
        %v1214 = vor.u32 %v1212, %v1213
        %v1215 = vshll.u32 2102212464, %v1203
        %v1216 = vshrl.u32 920167782, %v1204
        %v1217 = vor.u32 %v1215, %v1216
        %v1218 = vshll.u32 920167782, %v1203
        %v1219 = vshrl.u32 1326507024, %v1204
        %v1220 = vor.u32 %v1218, %v1219
        %vm1221 = vcmp.lt.s32.totalorder %v1202, 1
        %vm1222 = vcmp.lt.s32.totalorder %v1202, 2
        %vm1223 = vcmp.lt.s32.totalorder %v1202, 3
        %vm1224 = vcmp.lt.s32.totalorder %v1202, 4
        %v1225 = vsel %vm1221, %v1205, %v1208
        %v1226 = vsel %vm1224, %v1214, 2102212464
        %v1227 = vsel %vm1223, %v1211, %v1226
        %v1228 = vsel %vm1222, %v1225, %v1227
        %v1229 = vsel %vm1221, %v1208, %v1211
        %v1230 = vsel %vm1224, %v1217, 920167782
        %v1231 = vsel %vm1223, %v1214, %v1230
        %v1232 = vsel %vm1222, %v1229, %v1231
        %v1233 = vsel %vm1221, %v1211, %v1214
        %v1234 = vsel %vm1224, %v1220, 1326507024
        %v1235 = vsel %vm1223, %v1217, %v1234
        %v1236 = vsel %vm1222, %v1233, %v1235
        %v1237 = vshll.u32 %v1197, 8
        %v1238 = vand.u32 %v1237, 65535
        %v1239 = vshrl.u32 %v1237, 16
        %v1240 = vand.u32 %v1236, 65535
        %v1241 = vshrl.u32 %v1236, 16
        %v1242 = vmul.u32 %v1238, %v1240
        %v1243 = vmul.u32 %v1238, %v1241
        %v1244 = vmul.u32 %v1239, %v1240
        %v1245 = vmul.u32 %v1239, %v1241
        %v1246 = vshll.u32 %v1243, 16
        %v1247 = vshrl.u32 %v1243, 16
        %v1248 = vshll.u32 %v1244, 16
        %v1249 = vshrl.u32 %v1244, 16
        %vm1250 = vc.u32 %v1242, %v1246
        %v1251 = vsel %vm1250, 1, 0
        %v1252 = vadd.s32 %v1242, %v1246
        %v1253 = vadd.s32 %v1245, %v1251
        %vm1254 = vc.u32 %v1252, %v1248
        %v1255 = vsel %vm1254, 1, 0
        %v1256 = vadd.s32 %v1252, %v1248
        %v1257 = vadd.s32 %v1253, %v1255
        %v1258 = vadd.s32 %v1257, %v1247
        %v1259 = vadd.s32 %v1258, %v1249
        %v1260 = vand.u32 %v1237, 65535
        %v1261 = vshrl.u32 %v1237, 16
        %v1262 = vand.u32 %v1232, 65535
        %v1263 = vshrl.u32 %v1232, 16
        %v1264 = vmul.u32 %v1260, %v1262
        %v1265 = vmul.u32 %v1260, %v1263
        %v1266 = vmul.u32 %v1261, %v1262
        %v1267 = vmul.u32 %v1261, %v1263
        %v1268 = vshll.u32 %v1265, 16
        %v1269 = vshrl.u32 %v1265, 16
        %v1270 = vshll.u32 %v1266, 16
        %v1271 = vshrl.u32 %v1266, 16
        %vm1272 = vc.u32 %v1264, %v1268
        %v1273 = vsel %vm1272, 1, 0
        %v1274 = vadd.s32 %v1264, %v1268
        %v1275 = vadd.s32 %v1267, %v1273
        %vm1276 = vc.u32 %v1274, %v1270
        %v1277 = vsel %vm1276, 1, 0
        %v1278 = vadd.s32 %v1274, %v1270
        %v1279 = vadd.s32 %v1275, %v1277
        %v1280 = vadd.s32 %v1279, %v1269
        %v1281 = vadd.s32 %v1280, %v1271
        %v1282 = vmul.u32 %v1237, %v1228
        %v1283 = vadd.s32 %v1259, %v1278
        %vm1284 = vc.u32 %v1259, %v1278
        %v1285 = vadd.s32 %v1281, 1
        %v1286 = vsel %vm1284, %v1285, %v1281
        %v1287 = vadd.s32 %v1282, %v1286
        %v1288 = vadd.s32 %v1287, 536870912
        %v1289 = vshrl.u32 %v1288, 30
        %v1290 = vshll.u32 %v1289, 30
        %v1291 = vsub.s32 %v1287, %v1290
        %vm1292 = vcmp.lt.s32.totalorder %v1291, 0
        %v1293 = vsub.s32 0, %v1291
        %v1294 = vsel %vm1292, %v1293, %v1291
        %v1295 = vclz %v1294
        %v1296 = vsub.s32 %v1295, 2
        %vm1297 = vcmp.gt.s32.totalorder 0, %v1296
        %v1298 = vsel %vm1297, 0, %v1296
        %v1299 = vsub.s32 32, %v1298
        %v1300 = vshll.u32 %v1291, %v1298
        %v1301 = vshrl.u32 %v1283, %v1299
        %v1302 = vor.u32 %v1300, %v1301
        %v1303 = vsub.s32 4294967266, %v1298
        %v1304 = vadd.s32 %v1303, 127
        %v1305 = vshll.u32 %v1304, 23
        %v1306 = vor.u32 4788187, %v1305
        %v1307 = vand.u32 2147483647, %v1306
        %v1309 = vcvt.s32.f32 %v1302
        %v1310 = vmul.f32 %v1309, %v1307
        %v1311 = vxor.u32 %v1310, 2147483648
        %v1312 = vsel %vm1191, %v1311, %v1310
        %v1313 = vsub.s32 4, %v1289
        %v1314 = vsel %vm1191, %v1313, %v1289
        %v1315 = vsel %vm1190, %v1188, %v1312
        %v1316 = vsel %vm1190, 0, %v1314
        %v1317 = vmul.f32 %v1315, %v1315
        %v1318 = vmul.f32 %v1317, -0.001358992
        %v1319 = vadd.f32 %v1318, 0.041655596
        %v1320 = vmul.f32 %v1317, %v1319
        %v1321 = vadd.f32 %v1320, -0.4999988
        %v1322 = vmul.f32 %v1317, %v1321
        %v1323 = vadd.f32 1.0, %v1322
        %v1324 = vmul.f32 %v1315, %v1315
        %v1325 = vmul.f32 %v1324, -0.00019511016
        %v1326 = vadd.f32 %v1325, 0.008332121
        %v1327 = vmul.f32 %v1324, %v1326
        %v1328 = vadd.f32 %v1327, -0.16666654
        %v1329 = vmul.f32 %v1324, %v1328
        %v1330 = vadd.f32 %v1329, 1.0
        %v1331 = vmul.f32 %v1330, %v1315
        %vm1332 = vweird.f32 %v1188
        %v1333 = vand.u32 %v1316, 3
        %vm1334 = vcmp.lt.s32.totalorder %v1333, 2
        %vm1335 = vcmp.eq.s32.totalorder %v1333, 0
        %v1336 = vxor.u32 %v1331, 2147483648
        %v1337 = vsel %vm1335, %v1323, %v1336
        %vm1338 = vcmp.eq.s32.totalorder %v1333, 2
        %v1339 = vxor.u32 %v1323, 2147483648
        %v1340 = vsel %vm1338, %v1339, %v1331
        %v1341 = vsel %vm1334, %v1337, %v1340
        %v1342 = vsel %vm1332, nan, %v1341
        %v1343 = vmul.f32 %v1187, %v1342
        %v1344 = vand.u32 2147483647, %v1188
        %vm1345 = vcmp.le.f32.partialorder %v1344, 0.7853982
        %vm1346 = vcmp.lt.s32.totalorder %v1188, 0
        %v1347 = vand.u32 %v1188, 2139095040
        %v1348 = vshrl.u32 %v1347, 23
        %v1349 = vsub.s32 %v1348, 127
        %v1350 = vand.u32 2147483647, %v1188
        %v1351 = vand.u32 %v1350, 8388607
        %v1352 = vor.u32 %v1351, 8388608
        %v1353 = vsub.s32 0, %v1352
        %v1354 = vadd.s32 %v1349, 1
        %vm1355 = vcmp.gt.s32.totalorder %v1354, 0
        %v1356 = vsel %vm1355, %v1354, 0
        %v1357 = vshrl.u32 %v1356, 5
        %v1358 = vand.u32 %v1356, 31
        %v1359 = vsub.s32 32, %v1358
        %v1360 = vshrl.u32 683565275, %v1359
        %v1361 = vshll.u32 683565275, %v1358
        %v1362 = vshrl.u32 2475754826, %v1359
        %v1363 = vor.u32 %v1361, %v1362
        %v1364 = vshll.u32 2475754826, %v1358
        %v1365 = vshrl.u32 2131351028, %v1359
        %v1366 = vor.u32 %v1364, %v1365
        %v1367 = vshll.u32 2131351028, %v1358
        %v1368 = vshrl.u32 2102212464, %v1359
        %v1369 = vor.u32 %v1367, %v1368
        %v1370 = vshll.u32 2102212464, %v1358
        %v1371 = vshrl.u32 920167782, %v1359
        %v1372 = vor.u32 %v1370, %v1371
        %v1373 = vshll.u32 920167782, %v1358
        %v1374 = vshrl.u32 1326507024, %v1359
        %v1375 = vor.u32 %v1373, %v1374
        %vm1376 = vcmp.lt.s32.totalorder %v1357, 1
        %vm1377 = vcmp.lt.s32.totalorder %v1357, 2
        %vm1378 = vcmp.lt.s32.totalorder %v1357, 3
        %vm1379 = vcmp.lt.s32.totalorder %v1357, 4
        %v1380 = vsel %vm1376, %v1360, %v1363
        %v1381 = vsel %vm1379, %v1369, 2102212464
        %v1382 = vsel %vm1378, %v1366, %v1381
        %v1383 = vsel %vm1377, %v1380, %v1382
        %v1384 = vsel %vm1376, %v1363, %v1366
        %v1385 = vsel %vm1379, %v1372, 920167782
        %v1386 = vsel %vm1378, %v1369, %v1385
        %v1387 = vsel %vm1377, %v1384, %v1386
        %v1388 = vsel %vm1376, %v1366, %v1369
        %v1389 = vsel %vm1379, %v1375, 1326507024
        %v1390 = vsel %vm1378, %v1372, %v1389
        %v1391 = vsel %vm1377, %v1388, %v1390
        %v1392 = vshll.u32 %v1352, 8
        %v1393 = vand.u32 %v1392, 65535
        %v1394 = vshrl.u32 %v1392, 16
        %v1395 = vand.u32 %v1391, 65535
        %v1396 = vshrl.u32 %v1391, 16
        %v1397 = vmul.u32 %v1393, %v1395
        %v1398 = vmul.u32 %v1393, %v1396
        %v1399 = vmul.u32 %v1394, %v1395
        %v1400 = vmul.u32 %v1394, %v1396
        %v1401 = vshll.u32 %v1398, 16
        %v1402 = vshrl.u32 %v1398, 16
        %v1403 = vshll.u32 %v1399, 16
        %v1404 = vshrl.u32 %v1399, 16
        %vm1405 = vc.u32 %v1397, %v1401
        %v1406 = vsel %vm1405, 1, 0
        %v1407 = vadd.s32 %v1397, %v1401
        %v1408 = vadd.s32 %v1400, %v1406
        %vm1409 = vc.u32 %v1407, %v1403
        %v1410 = vsel %vm1409, 1, 0
        %v1411 = vadd.s32 %v1407, %v1403
        %v1412 = vadd.s32 %v1408, %v1410
        %v1413 = vadd.s32 %v1412, %v1402
        %v1414 = vadd.s32 %v1413, %v1404
        %v1415 = vand.u32 %v1392, 65535
        %v1416 = vshrl.u32 %v1392, 16
        %v1417 = vand.u32 %v1387, 65535
        %v1418 = vshrl.u32 %v1387, 16
        %v1419 = vmul.u32 %v1415, %v1417
        %v1420 = vmul.u32 %v1415, %v1418
        %v1421 = vmul.u32 %v1416, %v1417
        %v1422 = vmul.u32 %v1416, %v1418
        %v1423 = vshll.u32 %v1420, 16
        %v1424 = vshrl.u32 %v1420, 16
        %v1425 = vshll.u32 %v1421, 16
        %v1426 = vshrl.u32 %v1421, 16
        %vm1427 = vc.u32 %v1419, %v1423
        %v1428 = vsel %vm1427, 1, 0
        %v1429 = vadd.s32 %v1419, %v1423
        %v1430 = vadd.s32 %v1422, %v1428
        %vm1431 = vc.u32 %v1429, %v1425
        %v1432 = vsel %vm1431, 1, 0
        %v1433 = vadd.s32 %v1429, %v1425
        %v1434 = vadd.s32 %v1430, %v1432
        %v1435 = vadd.s32 %v1434, %v1424
        %v1436 = vadd.s32 %v1435, %v1426
        %v1437 = vmul.u32 %v1392, %v1383
        %v1438 = vadd.s32 %v1414, %v1433
        %vm1439 = vc.u32 %v1414, %v1433
        %v1440 = vadd.s32 %v1436, 1
        %v1441 = vsel %vm1439, %v1440, %v1436
        %v1442 = vadd.s32 %v1437, %v1441
        %v1443 = vadd.s32 %v1442, 536870912
        %v1444 = vshrl.u32 %v1443, 30
        %v1445 = vshll.u32 %v1444, 30
        %v1446 = vsub.s32 %v1442, %v1445
        %vm1447 = vcmp.lt.s32.totalorder %v1446, 0
        %v1448 = vsub.s32 0, %v1446
        %v1449 = vsel %vm1447, %v1448, %v1446
        %v1450 = vclz %v1449
        %v1451 = vsub.s32 %v1450, 2
        %vm1452 = vcmp.gt.s32.totalorder 0, %v1451
        %v1453 = vsel %vm1452, 0, %v1451
        %v1454 = vsub.s32 32, %v1453
        %v1455 = vshll.u32 %v1446, %v1453
        %v1456 = vshrl.u32 %v1438, %v1454
        %v1457 = vor.u32 %v1455, %v1456
        %v1458 = vsub.s32 4294967266, %v1453
        %v1459 = vadd.s32 %v1458, 127
        %v1460 = vshll.u32 %v1459, 23
        %v1461 = vor.u32 4788187, %v1460
        %v1462 = vand.u32 2147483647, %v1461
        %v1464 = vcvt.s32.f32 %v1457
        %v1465 = vmul.f32 %v1464, %v1462
        %v1466 = vxor.u32 %v1465, 2147483648
        %v1467 = vsel %vm1346, %v1466, %v1465
        %v1468 = vsub.s32 4, %v1444
        %v1469 = vsel %vm1346, %v1468, %v1444
        %v1470 = vsel %vm1345, %v1188, %v1467
        %v1471 = vsel %vm1345, 0, %v1469
        %v1472 = vmul.f32 %v1470, %v1470
        %v1473 = vmul.f32 %v1472, -0.001358992
        %v1474 = vadd.f32 %v1473, 0.041655596
        %v1475 = vmul.f32 %v1472, %v1474
        %v1476 = vadd.f32 %v1475, -0.4999988
        %v1477 = vmul.f32 %v1472, %v1476
        %v1478 = vadd.f32 1.0, %v1477
        %v1479 = vmul.f32 %v1470, %v1470
        %v1480 = vmul.f32 %v1479, -0.00019511016
        %v1481 = vadd.f32 %v1480, 0.008332121
        %v1482 = vmul.f32 %v1479, %v1481
        %v1483 = vadd.f32 %v1482, -0.16666654
        %v1484 = vmul.f32 %v1479, %v1483
        %v1485 = vadd.f32 %v1484, 1.0
        %v1486 = vmul.f32 %v1485, %v1470
        %vm1487 = vweird.f32 %v1188
        %v1488 = vadd.s32 %v1471, 3
        %v1489 = vand.u32 %v1488, 3
        %vm1490 = vcmp.lt.s32.totalorder %v1489, 2
        %vm1491 = vcmp.eq.s32.totalorder %v1489, 0
        %v1492 = vxor.u32 %v1486, 2147483648
        %v1493 = vsel %vm1491, %v1478, %v1492
        %vm1494 = vcmp.eq.s32.totalorder %v1489, 2
        %v1495 = vxor.u32 %v1478, 2147483648
        %v1496 = vsel %vm1494, %v1495, %v1486
        %v1497 = vsel %vm1490, %v1493, %v1496
        %v1498 = vsel %vm1487, nan, %v1497
        %v1499 = vmul.f32 %v1187, %v1498
        %v1500 = vmul.f32 %v398, %v1028
        %v1501 = vmul.f32 %v554, %v1184
        %v1502 = vsub.f32 %v1500, %v1501
        %v1503 = vmul.f32 %v398, %v1184
        %v1504 = vmul.f32 %v554, %v1028
        %v1505 = vadd.f32 %v1503, %v1504
        %v1506 = vmul.f32 %v398, %v1343
        %v1507 = vmul.f32 %v554, %v1499
        %v1508 = vsub.f32 %v1506, %v1507
        %v1509 = vmul.f32 %v398, %v1499
        %v1510 = vmul.f32 %v554, %v1343
        %v1511 = vadd.f32 %v1509, %v1510
        %v1512 = vadd.f32 %v1502, %v1508
        %v1513 = vadd.f32 %v1505, %v1511
        %v1514 = vsub.f32 %v398, %v1512
        %v1515 = vsub.f32 %v554, %v1513
        %v1516 = vmul.f32 %v1028, %v713
        %v1517 = vmul.f32 %v1184, %v869
        %v1518 = vsub.f32 %v1516, %v1517
        %v1519 = vmul.f32 %v1028, %v869
        %v1520 = vmul.f32 %v1184, %v713
        %v1521 = vadd.f32 %v1519, %v1520
        %v1522 = vmul.f32 %v1343, %v713
        %v1523 = vmul.f32 %v1499, %v869
        %v1524 = vsub.f32 %v1522, %v1523
        %v1525 = vmul.f32 %v1343, %v869
        %v1526 = vmul.f32 %v1499, %v713
        %v1527 = vadd.f32 %v1525, %v1526
        %v1528 = vmul.f32 %v1502, %v1518
        %v1529 = vmul.f32 %v1505, %v1521
        %v1530 = vsub.f32 %v1528, %v1529
        %v1531 = vmul.f32 %v1502, %v1521
        %v1532 = vmul.f32 %v1505, %v1518
        %v1533 = vadd.f32 %v1531, %v1532
        %v1534 = vmul.f32 %v1508, %v1524
        %v1535 = vmul.f32 %v1511, %v1527
        %v1536 = vsub.f32 %v1534, %v1535
        %v1537 = vmul.f32 %v1508, %v1527
        %v1538 = vmul.f32 %v1511, %v1524
        %v1539 = vadd.f32 %v1537, %v1538
        %v1540 = vadd.f32 %v1530, %v1536
        %v1541 = vadd.f32 %v1533, %v1539
        %v1542 = vadd.f32 %v1514, %v1540
        %v1543 = vadd.f32 %v1515, %v1541
        %v1544 = vmul.f32 %v1518, %v713
        %v1545 = vmul.f32 %v1521, %v869
        %v1546 = vsub.f32 %v1544, %v1545
        %v1547 = vmul.f32 %v1518, %v869
        %v1548 = vmul.f32 %v1521, %v713
        %v1549 = vadd.f32 %v1547, %v1548
        %v1550 = vmul.f32 %v1524, %v713
        %v1551 = vmul.f32 %v1527, %v869
        %v1552 = vsub.f32 %v1550, %v1551
        %v1553 = vmul.f32 %v1524, %v869
        %v1554 = vmul.f32 %v1527, %v713
        %v1555 = vadd.f32 %v1553, %v1554
        %v1556 = vmul.f32 %v1530, %v1546
        %v1557 = vmul.f32 %v1533, %v1549
        %v1558 = vsub.f32 %v1556, %v1557
        %v1559 = vmul.f32 %v1530, %v1549
        %v1560 = vmul.f32 %v1533, %v1546
        %v1561 = vadd.f32 %v1559, %v1560
        %v1562 = vmul.f32 %v1536, %v1552
        %v1563 = vmul.f32 %v1539, %v1555
        %v1564 = vsub.f32 %v1562, %v1563
        %v1565 = vmul.f32 %v1536, %v1555
        %v1566 = vmul.f32 %v1539, %v1552
        %v1567 = vadd.f32 %v1565, %v1566
        %v1568 = vadd.f32 %v1558, %v1564
        %v1569 = vadd.f32 %v1561, %v1567
        %v1570 = vsub.f32 %v1542, %v1568
        %v1571 = vsub.f32 %v1543, %v1569
        %v1572 = vmul.f32 %v1546, %v713
        %v1573 = vmul.f32 %v1549, %v869
        %v1574 = vsub.f32 %v1572, %v1573
        %v1575 = vmul.f32 %v1546, %v869
        %v1576 = vmul.f32 %v1549, %v713
        %v1577 = vadd.f32 %v1575, %v1576
        %v1578 = vmul.f32 %v1552, %v713
        %v1579 = vmul.f32 %v1555, %v869
        %v1580 = vsub.f32 %v1578, %v1579
        %v1581 = vmul.f32 %v1552, %v869
        %v1582 = vmul.f32 %v1555, %v713
        %v1583 = vadd.f32 %v1581, %v1582
        %v1584 = vmul.f32 %v1558, %v1574
        %v1585 = vmul.f32 %v1561, %v1577
        %v1586 = vsub.f32 %v1584, %v1585
        %v1587 = vmul.f32 %v1558, %v1577
        %v1588 = vmul.f32 %v1561, %v1574
        %v1589 = vadd.f32 %v1587, %v1588
        %v1590 = vmul.f32 %v1564, %v1580
        %v1591 = vmul.f32 %v1567, %v1583
        %v1592 = vsub.f32 %v1590, %v1591
        %v1593 = vmul.f32 %v1564, %v1583
        %v1594 = vmul.f32 %v1567, %v1580
        %v1595 = vadd.f32 %v1593, %v1594
        %v1596 = vadd.f32 %v1586, %v1592
        %v1597 = vadd.f32 %v1589, %v1595
        %v1598 = vadd.f32 %v1570, %v1596
        %v1599 = vadd.f32 %v1571, %v1597
        %v1600 = vmul.f32 %v1574, %v713
        %v1601 = vmul.f32 %v1577, %v869
        %v1602 = vsub.f32 %v1600, %v1601
        %v1603 = vmul.f32 %v1574, %v869
        %v1604 = vmul.f32 %v1577, %v713
        %v1605 = vadd.f32 %v1603, %v1604
        %v1606 = vmul.f32 %v1580, %v713
        %v1607 = vmul.f32 %v1583, %v869
        %v1608 = vsub.f32 %v1606, %v1607
        %v1609 = vmul.f32 %v1580, %v869
        %v1610 = vmul.f32 %v1583, %v713
        %v1611 = vadd.f32 %v1609, %v1610
        %v1612 = vmul.f32 %v1586, %v1602
        %v1613 = vmul.f32 %v1589, %v1605
        %v1614 = vsub.f32 %v1612, %v1613
        %v1615 = vmul.f32 %v1586, %v1605
        %v1616 = vmul.f32 %v1589, %v1602
        %v1617 = vadd.f32 %v1615, %v1616
        %v1618 = vmul.f32 %v1592, %v1608
        %v1619 = vmul.f32 %v1595, %v1611
        %v1620 = vsub.f32 %v1618, %v1619
        %v1621 = vmul.f32 %v1592, %v1611
        %v1622 = vmul.f32 %v1595, %v1608
        %v1623 = vadd.f32 %v1621, %v1622
        %v1624 = vadd.f32 %v1614, %v1620
        %v1625 = vadd.f32 %v1617, %v1623
        %v1626 = vsub.f32 %v1598, %v1624
        %v1627 = vsub.f32 %v1599, %v1625
        %v1628 = vmul.f32 %v1602, %v713
        %v1629 = vmul.f32 %v1605, %v869
        %v1630 = vsub.f32 %v1628, %v1629
        %v1631 = vmul.f32 %v1602, %v869
        %v1632 = vmul.f32 %v1605, %v713
        %v1633 = vadd.f32 %v1631, %v1632
        %v1634 = vmul.f32 %v1608, %v713
        %v1635 = vmul.f32 %v1611, %v869
        %v1636 = vsub.f32 %v1634, %v1635
        %v1637 = vmul.f32 %v1608, %v869
        %v1638 = vmul.f32 %v1611, %v713
        %v1639 = vadd.f32 %v1637, %v1638
        %v1640 = vmul.f32 %v1614, %v1630
        %v1641 = vmul.f32 %v1617, %v1633
        %v1642 = vsub.f32 %v1640, %v1641
        %v1643 = vmul.f32 %v1614, %v1633
        %v1644 = vmul.f32 %v1617, %v1630
        %v1645 = vadd.f32 %v1643, %v1644
        %v1646 = vmul.f32 %v1620, %v1636
        %v1647 = vmul.f32 %v1623, %v1639
        %v1648 = vsub.f32 %v1646, %v1647
        %v1649 = vmul.f32 %v1620, %v1639
        %v1650 = vmul.f32 %v1623, %v1636
        %v1651 = vadd.f32 %v1649, %v1650
        %v1652 = vadd.f32 %v1642, %v1648
        %v1653 = vadd.f32 %v1645, %v1651
        %v1654 = vadd.f32 %v1626, %v1652
        %v1655 = vadd.f32 %v1627, %v1653
        %v1656 = vmul.f32 %v1630, %v713
        %v1657 = vmul.f32 %v1633, %v869
        %v1658 = vsub.f32 %v1656, %v1657
        %v1659 = vmul.f32 %v1630, %v869
        %v1660 = vmul.f32 %v1633, %v713
        %v1661 = vadd.f32 %v1659, %v1660
        %v1662 = vmul.f32 %v1636, %v713
        %v1663 = vmul.f32 %v1639, %v869
        %v1664 = vsub.f32 %v1662, %v1663
        %v1665 = vmul.f32 %v1636, %v869
        %v1666 = vmul.f32 %v1639, %v713
        %v1667 = vadd.f32 %v1665, %v1666
        %v1668 = vmul.f32 %v1642, %v1658
        %v1669 = vmul.f32 %v1645, %v1661
        %v1670 = vsub.f32 %v1668, %v1669
        %v1671 = vmul.f32 %v1642, %v1661
        %v1672 = vmul.f32 %v1645, %v1658
        %v1673 = vadd.f32 %v1671, %v1672
        %v1674 = vmul.f32 %v1648, %v1664
        %v1675 = vmul.f32 %v1651, %v1667
        %v1676 = vsub.f32 %v1674, %v1675
        %v1677 = vmul.f32 %v1648, %v1667
        %v1678 = vmul.f32 %v1651, %v1664
        %v1679 = vadd.f32 %v1677, %v1678
        %v1680 = vadd.f32 %v1670, %v1676
        %v1681 = vadd.f32 %v1673, %v1679
        %v1682 = vsub.f32 %v1654, %v1680
        %v1683 = vsub.f32 %v1655, %v1681
        %v1684 = vmul.f32 %v1658, %v713
        %v1685 = vmul.f32 %v1661, %v869
        %v1686 = vsub.f32 %v1684, %v1685
        %v1687 = vmul.f32 %v1658, %v869
        %v1688 = vmul.f32 %v1661, %v713
        %v1689 = vadd.f32 %v1687, %v1688
        %v1690 = vmul.f32 %v1664, %v713
        %v1691 = vmul.f32 %v1667, %v869
        %v1692 = vsub.f32 %v1690, %v1691
        %v1693 = vmul.f32 %v1664, %v869
        %v1694 = vmul.f32 %v1667, %v713
        %v1695 = vadd.f32 %v1693, %v1694
        %v1696 = vmul.f32 %v1670, %v1686
        %v1697 = vmul.f32 %v1673, %v1689
        %v1698 = vsub.f32 %v1696, %v1697
        %v1699 = vmul.f32 %v1670, %v1689
        %v1700 = vmul.f32 %v1673, %v1686
        %v1701 = vadd.f32 %v1699, %v1700
        %v1702 = vmul.f32 %v1676, %v1692
        %v1703 = vmul.f32 %v1679, %v1695
        %v1704 = vsub.f32 %v1702, %v1703
        %v1705 = vmul.f32 %v1676, %v1695
        %v1706 = vmul.f32 %v1679, %v1692
        %v1707 = vadd.f32 %v1705, %v1706
        %v1708 = vadd.f32 %v1698, %v1704
        %v1709 = vadd.f32 %v1701, %v1707
        %v1710 = vadd.f32 %v1682, %v1708
        %v1711 = vadd.f32 %v1683, %v1709
        %v1712 = vmul.f32 %v1686, %v713
        %v1713 = vmul.f32 %v1689, %v869
        %v1714 = vsub.f32 %v1712, %v1713
        %v1715 = vmul.f32 %v1686, %v869
        %v1716 = vmul.f32 %v1689, %v713
        %v1717 = vadd.f32 %v1715, %v1716
        %v1718 = vmul.f32 %v1692, %v713
        %v1719 = vmul.f32 %v1695, %v869
        %v1720 = vsub.f32 %v1718, %v1719
        %v1721 = vmul.f32 %v1692, %v869
        %v1722 = vmul.f32 %v1695, %v713
        %v1723 = vadd.f32 %v1721, %v1722
        %v1724 = vmul.f32 %v1698, %v1714
        %v1725 = vmul.f32 %v1701, %v1717
        %v1726 = vsub.f32 %v1724, %v1725
        %v1727 = vmul.f32 %v1698, %v1717
        %v1728 = vmul.f32 %v1701, %v1714
        %v1729 = vadd.f32 %v1727, %v1728
        %v1730 = vmul.f32 %v1704, %v1720
        %v1731 = vmul.f32 %v1707, %v1723
        %v1732 = vsub.f32 %v1730, %v1731
        %v1733 = vmul.f32 %v1704, %v1723
        %v1734 = vmul.f32 %v1707, %v1720
        %v1735 = vadd.f32 %v1733, %v1734
        %v1736 = vadd.f32 %v1726, %v1732
        %v1737 = vadd.f32 %v1729, %v1735
        %v1738 = vsub.f32 %v1710, %v1736
        %v1739 = vsub.f32 %v1711, %v1737
        %v1740 = vmul.f32 %v1714, %v713
        %v1741 = vmul.f32 %v1717, %v869
        %v1742 = vsub.f32 %v1740, %v1741
        %v1743 = vmul.f32 %v1714, %v869
        %v1744 = vmul.f32 %v1717, %v713
        %v1745 = vadd.f32 %v1743, %v1744
        %v1746 = vmul.f32 %v1720, %v713
        %v1747 = vmul.f32 %v1723, %v869
        %v1748 = vsub.f32 %v1746, %v1747
        %v1749 = vmul.f32 %v1720, %v869
        %v1750 = vmul.f32 %v1723, %v713
        %v1751 = vadd.f32 %v1749, %v1750
        %v1752 = vmul.f32 %v1726, %v1742
        %v1753 = vmul.f32 %v1729, %v1745
        %v1754 = vsub.f32 %v1752, %v1753
        %v1755 = vmul.f32 %v1726, %v1745
        %v1756 = vmul.f32 %v1729, %v1742
        %v1757 = vadd.f32 %v1755, %v1756
        %v1758 = vmul.f32 %v1732, %v1748
        %v1759 = vmul.f32 %v1735, %v1751
        %v1760 = vsub.f32 %v1758, %v1759
        %v1761 = vmul.f32 %v1732, %v1751
        %v1762 = vmul.f32 %v1735, %v1748
        %v1763 = vadd.f32 %v1761, %v1762
        %v1764 = vadd.f32 %v1754, %v1760
        %v1765 = vadd.f32 %v1757, %v1763
        %v1766 = vadd.f32 %v1738, %v1764
        %v1767 = vadd.f32 %v1739, %v1765
        %1768 = vst [vmem:[%s230] sm:$0xff] %v1766
        %1769 = vst [vmem:[%s237] sm:$0xff] %v1767
        %s1770 = sand.u32 %s87, 1
        %s1771 = scalar_lea.sflag [#allocation4], %s1770
        %s1772 = sand.u32 %s87, 1
        %s1773 = smul.addr %s1772, 8
        %s1774 = scalar_lea.vmem [#allocation7], %s1773
        %s1775 = sand.u32 %s113, 1
        %s1776 = scalar_lea.sflag [#allocation9], %s1775
        %s1777 = sand.u32 %s113, 1
        %s1778 = smul.addr %s1777, 8
        %s1779 = scalar_lea.vmem [#allocation8], %s1778
        // Predicated region
        $region37: #{tpu_custom_call.1} parent=27 // pred_check
          %p1780 = pneg %p97
        $region38: #{tpu_custom_call.1} parent=27 // pred_check_branch
          %1782 = sbr.rel (%p1780) target = $region40
        $region39: #{tpu_custom_call.1} parent=27 // pred_region
          %1784 = vsyncadd %s1771, 0
          %s1785 = smul.addr %s27, 8
          %s1786 = scalar_lea.hbm %s2, %s1785
          %s1788 = sshll.u32 %s1774, 4
          %s1789 = int_to_ptr.vmem [resolvable:$true] %s1788
          %s1790 = sshll.u32 %s1786, 4
          %s1791 = int_to_ptr.hbm [resolvable:$true] %s1790
          %1793 = dma.vmem_to_hbm [thread:$0]  %s1789, 128, %s1791, %s1771
        $region40: #{tpu_custom_call.1} parent=27 // pred_fallthru
          _
        // Predicated region
        $region41: #{tpu_custom_call.1} parent=27 // pred_check
          %p1794 = pneg %p123
        $region42: #{tpu_custom_call.1} parent=27 // pred_check_branch
          %1796 = sbr.rel (%p1794) target = $region44
        $region43: #{tpu_custom_call.1} parent=27 // pred_region
          %1798 = vsyncadd %s1776, 0
          %s1799 = smul.addr %s27, 8
          %s1800 = scalar_lea.hbm %s3, %s1799
          %s1802 = sshll.u32 %s1779, 4
          %s1803 = int_to_ptr.vmem [resolvable:$true] %s1802
          %s1804 = sshll.u32 %s1800, 4
          %s1805 = int_to_ptr.hbm [resolvable:$true] %s1804
          %1807 = dma.vmem_to_hbm [thread:$0]  %s1803, 128, %s1805, %s1776
        $region44: #{tpu_custom_call.1} parent=27 // pred_fallthru
          _
      $region28: #{tpu_custom_call.1} parent=5 // pred_fallthru
        _
      %p1808 = scmp.le.s32.totalorder 2, %s22
      // Predicated region
      $region45: #{tpu_custom_call.1} parent=5 // pred_check
        %p1809 = pneg %p1808
      $region46: #{tpu_custom_call.1} parent=5 // pred_check_branch
        %1811 = sbr.rel (%p1809) target = $region48
      $region47: #{tpu_custom_call.1} parent=5 // pred_region
        %s1812 = ssub.s32 %s22, 2
        // Predicated region
        $region49: #{tpu_custom_call.1} parent=47 // pred_check
          %p1813 = pneg %p103
        $region50: #{tpu_custom_call.1} parent=47 // pred_check_branch
          %1815 = sbr.rel (%p1813) target = $region52
        $region51: #{tpu_custom_call.1} parent=47 // pred_region
          %s1816 = sand.u32 %s88, 1
          %s1817 = scalar_lea.sflag [#allocation4], %s1816
          %s1818 = sand.u32 %s88, 1
          %s1819 = smul.addr %s1818, 8
          %s1820 = scalar_lea.vmem [#allocation7], %s1819
          %1822 = dma.done %s1817, 128
        $region52: #{tpu_custom_call.1} parent=47 // pred_fallthru
          _
        // Predicated region
        $region53: #{tpu_custom_call.1} parent=47 // pred_check
          %p1823 = pneg %p129
        $region54: #{tpu_custom_call.1} parent=47 // pred_check_branch
          %1825 = sbr.rel (%p1823) target = $region56
        $region55: #{tpu_custom_call.1} parent=47 // pred_region
          %s1826 = sand.u32 %s114, 1
          %s1827 = scalar_lea.sflag [#allocation9], %s1826
          %s1828 = sand.u32 %s114, 1
          %s1829 = smul.addr %s1828, 8
          %s1830 = scalar_lea.vmem [#allocation8], %s1829
          %1832 = dma.done %s1827, 128
        $region56: #{tpu_custom_call.1} parent=47 // pred_fallthru
          _
      $region48: #{tpu_custom_call.1} parent=5 // pred_fallthru
        _
    $region6: #{tpu_custom_call.1} parent=1 // loop_footer
      %s26 = sadd.s32 1, %s22
    $region7: #{tpu_custom_call.1} parent=1 // loop_footer_branch
      %21 = sbr.rel target = $region3
    $region8: #{tpu_custom_call.1} parent=1 // loop_exit
      _
    %1833 = vsyncpa [#allocation3], 1
    %s1834 = scalar_lea.sflag [#allocation3], 1
    %1835 = vsyncpa %s1834, 1
    %1836 = vsyncpa [#allocation6], 1
    %s1837 = scalar_lea.sflag [#allocation6], 1
    %1838 = vsyncpa %s1837, 1
    %1839 = vsyncpa [#allocation4], 1
    %s1840 = scalar_lea.sflag [#allocation4], 1
    %1841 = vsyncpa %s1840, 1
    %1842 = vsyncpa [#allocation9], 1
    %s1843 = scalar_lea.sflag [#allocation9], 1
    %1844 = vsyncpa %s1843, 1

</llo_original>
